<compile_context>
chip_gen: v7x
topology: tpu7x:2x2x1
jax: 0.10.0
libtpu: 0.0.40
codegen_flags: <defaults>
</compile_context>

<pallas_src>
import jax
import jax.numpy as jnp
from jax.experimental import pallas as pl
from jax.experimental.pallas import tpu as pltpu

BN_EPS = 1e-3  # module explicitly sets eps=0.001


def _fused_add_conv1x1_bn_kernel(a_ref, b_ref, w_ref, gb_ref, o_ref, y_ref):
    # a_ref, b_ref : [N, Cin, HW]   f32 (full arrays; constant index_map -> fetched once)
    # w_ref        : [Cb, Cin]      f32 weight slice for this Cout block (cast in-kernel)
    # gb_ref       : [Cb, 2]        f32, column 0 = gamma, column 1 = beta
    # o_ref        : [N, Cb, HW]    output block
    # y_ref        : [N, Cb, HW]    f32 VMEM scratch for the conv intermediate
    n = a_ref.shape[0]
    hw = a_ref.shape[2]
    cb = w_ref.shape[0]
    inv_m = 1.0 / float(n * hw)

    # In-kernel bf16 cast of the weights (perf feedback: no wrapper-side cast op).
    w_bf16 = w_ref[...].astype(jnp.bfloat16)

    # Pass 1: add fused into the conv input; 1x1 conv == single MXU matmul
    # (bf16 operands, f32 accumulation). y is staged in VMEM scratch.
    sum_y = jnp.zeros((cb, 1), jnp.float32)
    for i in range(n):  # static unroll; n == 1 for this module
        s = a_ref[i] + b_ref[i]                                   # f32 add (VPU)
        y = jnp.dot(w_bf16, s.astype(jnp.bfloat16),
                    preferred_element_type=jnp.float32)           # [Cb, HW]
        y_ref[i] = y
        sum_y = sum_y + jnp.sum(y, axis=1, keepdims=True)

    mean = sum_y * inv_m                                          # [Cb, 1]

    # Pass 2: two-pass (centered) batch variance over the VMEM-resident y.
    sum_sq = jnp.zeros((cb, 1), jnp.float32)
    for i in range(n):
        d = y_ref[i] - mean
        sum_sq = sum_sq + jnp.sum(d * d, axis=1, keepdims=True)
    var = sum_sq * inv_m                                          # biased, matches PyTorch BN

    gamma = gb_ref[:, 0:1]
    beta = gb_ref[:, 1:2]
    scale = gamma * jax.lax.rsqrt(var + BN_EPS)                   # EUP rsqrt
    shift = beta - mean * scale

    # Pass 3: normalize + affine in a single FMA-able pass.
    for i in range(n):
        o_ref[i] = (y_ref[i] * scale + shift).astype(o_ref.dtype)


def _pick_cout_block(cout):
    # Prefer 2 grid steps (384) at this size: balanced across v7x's two cores and
    # minimal per-step overhead; fall back to smaller divisors / whole problem.
    for cb in (384, 256, 128):
        if cout % cb == 0:
            return cb
    return cout


def fused_add_conv1x1_bn(x225, x210, weight, gamma, beta, *, out_dtype=jnp.float32):
    """x225, x210: [N, Cin, H, W] (NCHW). weight: [Cout, Cin, 1, 1]. Returns NCHW [N, Cout, H, W]."""
    n, cin, h, w = x225.shape
    cout = weight.shape[0]
    hw = h * w
    cb = _pick_cout_block(cout)
    n_blocks = cout // cb

    # Pure reshapes only -- NO transposes; channel-first layout kept end-to-end.
    a3 = x225.reshape(n, cin, hw)
    b3 = x210.reshape(n, cin, hw)
    w2 = weight.reshape(cout, cin)  # stays f32; cast to bf16 inside the kernel
    gb = jnp.stack([gamma.astype(jnp.float32), beta.astype(jnp.float32)], axis=1)  # (Cout, 2)

    flops = 2 * n * hw * cin * cout + 8 * n * cout * hw
    bytes_accessed = (2 * n * cin * hw + n * cout * hw + cout * cin + 2 * cout) * 4

    out3 = pl.pallas_call(
        _fused_add_conv1x1_bn_kernel,
        out_shape=jax.ShapeDtypeStruct((n, cout, hw), out_dtype),
        grid_spec=pltpu.PrefetchScalarGridSpec(
            num_scalar_prefetch=0,
            grid=(n_blocks,),
            in_specs=[
                # Constant block index: a/b are DMA'd once and reused across Cout blocks.
                pl.BlockSpec((n, cin, hw), lambda j: (0, 0, 0)),
                pl.BlockSpec((n, cin, hw), lambda j: (0, 0, 0)),
                pl.BlockSpec((cb, cin), lambda j: (j, 0)),
                pl.BlockSpec((cb, 2), lambda j: (j, 0)),
            ],
            out_specs=pl.BlockSpec((n, cb, hw), lambda j: (0, j, 0)),
            scratch_shapes=[pltpu.VMEM((n, cb, hw), jnp.float32)],
        ),
        compiler_params=pltpu.CompilerParams(
            dimension_semantics=("parallel",),
        ),
        cost_estimate=pl.CostEstimate(
            flops=flops, transcendentals=cout, bytes_accessed=bytes_accessed
        ),
    )(a3, b3, w2, gb)

    # [N, Cout, HW] is already NCHW order -- reshape only.
    return out3.reshape(n, cout, h, w)


def _reference(x225, x210, weight, gamma, beta):
    """Pure-JAX f32 reference (add -> 1x1 conv -> training-mode BatchNorm2d)."""
    n, cin, h, w = x225.shape
    cout = weight.shape[0]
    s = (x225 + x210).reshape(n, cin, h * w)
    y = jnp.einsum("oc,nci->noi", weight.reshape(cout, cin), s)   # [N, Cout, HW]
    mean = jnp.mean(y, axis=(0, 2), keepdims=True)
    var = jnp.mean((y - mean) ** 2, axis=(0, 2), keepdims=True)
    out = (y - mean) * jax.lax.rsqrt(var + BN_EPS)
    out = out * gamma.reshape(1, cout, 1) + beta.reshape(1, cout, 1)
    return out.reshape(n, cout, h, w)


if __name__ == "__main__":
    key = jax.random.PRNGKey(0)
    k_a, k_b, k_w, k_g, k_be = jax.random.split(key, 5)

    # Shapes from the module: Conv2d(128, 768, 1x1, bias=False), inputs [1, 128, 14, 14].
    N, CIN, H, W = 1, 128, 14, 14
    COUT = 768

    x225 = jax.random.normal(k_a, (N, CIN, H, W), dtype=jnp.float32)
    x210 = jax.random.normal(k_b, (N, CIN, H, W), dtype=jnp.float32)

    conv_w = jax.random.normal(k_w, (COUT, CIN, 1, 1), dtype=jnp.float32) * 0.05
    bn_gamma = 1.0 + 0.1 * jax.random.normal(k_g, (COUT,), dtype=jnp.float32)
    bn_beta = 0.1 * jax.random.normal(k_be, (COUT,), dtype=jnp.float32)

    out = jax.block_until_ready(fused_add_conv1x1_bn(x225, x210, conv_w, bn_gamma, bn_beta))

    assert out.shape == (N, COUT, H, W), out.shape
    assert bool(jnp.all(jnp.isfinite(out)))

    ref = jax.block_until_ready(_reference(x225, x210, conv_w, bn_gamma, bn_beta))
    max_err = float(jnp.max(jnp.abs(out - ref)))
    # bf16 MXU inputs with f32 accumulation over K=128: loose tolerance.
    assert max_err < 0.1, f"max abs error vs f32 reference: {max_err}"

    print("KERNEL_OK")
</pallas_src>

<mosaic_0001>
module attributes {stable_mosaic.version = 11 : i64} {
  func.func @_fused_add_conv1x1_bn_kernel(%arg0: i32, %arg1: memref<1x128x196xf32, #tpu.memory_space<vmem>>, %arg2: memref<1x128x196xf32, #tpu.memory_space<vmem>>, %arg3: memref<384x128xf32, #tpu.memory_space<vmem>>, %arg4: memref<384x2xf32, #tpu.memory_space<vmem>>, %arg5: memref<1x384x196xf32, #tpu.memory_space<vmem>>, %arg6: memref<1x384x196xf32, #tpu.memory_space<vmem>>) attributes {dimension_semantics = [#tpu.dimension_semantics<parallel>], iteration_bounds = array<i64: 2>, scalar_prefetch = 0 : i64, scratch_operands = 1 : i64, tpu.core_type = #tpu.core_type<tc>, window_params = [{pipeline_mode = #tpu.pipeline_mode<synchronous>, transform_indices = @transform_0, window_bounds = array<i64: 1, 128, 196>}, {pipeline_mode = #tpu.pipeline_mode<synchronous>, transform_indices = @transform_1, window_bounds = array<i64: 1, 128, 196>}, {transform_indices = @transform_2, window_bounds = array<i64: 384, 128>}, {transform_indices = @transform_3, window_bounds = array<i64: 384, 2>}, {transform_indices = @transform_4, window_bounds = array<i64: 1, 384, 196>}]} {
    %c0 = arith.constant 0 : index
    %c0_0 = arith.constant 0 : index
    %0 = vector.load %arg3[%c0, %c0_0] : memref<384x128xf32, #tpu.memory_space<vmem>>, vector<384x128xf32>
    %1 = arith.truncf %0 : vector<384x128xf32> to vector<384x128xbf16>
    %cst = arith.constant 0.000000e+00 : f32
    %2 = vector.broadcast %cst : f32 to vector<384x1xf32>
    %c0_1 = arith.constant 0 : index
    %c0_2 = arith.constant 0 : index
    %c0_3 = arith.constant 0 : index
    %3 = vector.load %arg1[%c0_1, %c0_2, %c0_3] : memref<1x128x196xf32, #tpu.memory_space<vmem>>, vector<1x128x196xf32>
    %4 = vector.shape_cast %3 : vector<1x128x196xf32> to vector<128x196xf32>
    %c0_4 = arith.constant 0 : index
    %c0_5 = arith.constant 0 : index
    %c0_6 = arith.constant 0 : index
    %5 = vector.load %arg2[%c0_4, %c0_5, %c0_6] : memref<1x128x196xf32, #tpu.memory_space<vmem>>, vector<1x128x196xf32>
    %6 = vector.shape_cast %5 : vector<1x128x196xf32> to vector<128x196xf32>
    %7 = arith.addf %4, %6 : vector<128x196xf32>
    %8 = arith.truncf %7 : vector<128x196xf32> to vector<128x196xbf16>
    %cst_7 = arith.constant dense<0.000000e+00> : vector<384x196xf32>
    %9 = tpu.matmul %1, %8, %cst_7 {dimension_numbers = #tpu.dot_dimension_numbers<[1], [0], [0], [1], [0, 0, 1, 1], [], []>} : vector<384x128xbf16>, vector<128x196xbf16>, vector<384x196xf32> -> vector<384x196xf32>
    %c0_8 = arith.constant 0 : index
    %c0_9 = arith.constant 0 : index
    %c0_10 = arith.constant 0 : index
    %10 = vector.load %arg6[%c0_8, %c0_9, %c0_10] : memref<1x384x196xf32, #tpu.memory_space<vmem>>, vector<1x384x196xf32>
    %11 = vector.shape_cast %10 : vector<1x384x196xf32> to vector<384x196xf32>
    %12 = vector.shape_cast %9 : vector<384x196xf32> to vector<1x384x196xf32>
    tpu.vector_store %arg6[%c0_8, %c0_9, %c0_10], %12 {strides = array<i32>} : memref<1x384x196xf32, #tpu.memory_space<vmem>>, vector<1x384x196xf32>,
    %cst_11 = arith.constant dense<0.000000e+00> : vector<384xf32>
    %13 = vector.multi_reduction <add>, %9, %cst_11 [1] : vector<384x196xf32> to vector<384xf32>
    %14 = vector.shape_cast %13 : vector<384xf32> to vector<384x1xf32>
    %15 = arith.addf %2, %14 : vector<384x1xf32>
    %cst_12 = arith.constant 0.00510204071 : f32
    %16 = vector.broadcast %cst_12 : f32 to vector<384x1xf32>
    %17 = arith.mulf %15, %16 : vector<384x1xf32>
    %cst_13 = arith.constant 0.000000e+00 : f32
    %18 = vector.broadcast %cst_13 : f32 to vector<384x1xf32>
    %c0_14 = arith.constant 0 : index
    %c0_15 = arith.constant 0 : index
    %c0_16 = arith.constant 0 : index
    %19 = vector.load %arg6[%c0_14, %c0_15, %c0_16] : memref<1x384x196xf32, #tpu.memory_space<vmem>>, vector<1x384x196xf32>
    %20 = vector.shape_cast %19 : vector<1x384x196xf32> to vector<384x196xf32>
    %21 = vector.broadcast %17 : vector<384x1xf32> to vector<384x196xf32>
    %22 = arith.subf %20, %21 : vector<384x196xf32>
    %23 = arith.mulf %22, %22 : vector<384x196xf32>
    %cst_17 = arith.constant dense<0.000000e+00> : vector<384xf32>
    %24 = vector.multi_reduction <add>, %23, %cst_17 [1] : vector<384x196xf32> to vector<384xf32>
    %25 = vector.shape_cast %24 : vector<384xf32> to vector<384x1xf32>
    %26 = arith.addf %18, %25 : vector<384x1xf32>
    %cst_18 = arith.constant 0.00510204071 : f32
    %27 = vector.broadcast %cst_18 : f32 to vector<384x1xf32>
    %28 = arith.mulf %26, %27 : vector<384x1xf32>
    %c0_19 = arith.constant 0 : index
    %c0_20 = arith.constant 0 : index
    %29 = vector.load %arg4[%c0_19, %c0_20] : memref<384x2xf32, #tpu.memory_space<vmem>>, vector<384x1xf32>
    %c0_21 = arith.constant 0 : index
    %c1 = arith.constant 1 : index
    %30 = vector.load %arg4[%c0_21, %c1] : memref<384x2xf32, #tpu.memory_space<vmem>>, vector<384x1xf32>
    %cst_22 = arith.constant 1.000000e-03 : f32
    %31 = vector.broadcast %cst_22 : f32 to vector<384x1xf32>
    %32 = arith.addf %28, %31 : vector<384x1xf32>
    %33 = math.rsqrt %32 : vector<384x1xf32>
    %34 = arith.mulf %29, %33 : vector<384x1xf32>
    %35 = arith.mulf %17, %34 : vector<384x1xf32>
    %36 = arith.subf %30, %35 : vector<384x1xf32>
    %c0_23 = arith.constant 0 : index
    %c0_24 = arith.constant 0 : index
    %c0_25 = arith.constant 0 : index
    %37 = vector.load %arg6[%c0_23, %c0_24, %c0_25] : memref<1x384x196xf32, #tpu.memory_space<vmem>>, vector<1x384x196xf32>
    %38 = vector.shape_cast %37 : vector<1x384x196xf32> to vector<384x196xf32>
    %39 = vector.broadcast %34 : vector<384x1xf32> to vector<384x196xf32>
    %40 = arith.mulf %38, %39 : vector<384x196xf32>
    %41 = vector.broadcast %36 : vector<384x1xf32> to vector<384x196xf32>
    %42 = arith.addf %40, %41 : vector<384x196xf32>
    %c0_26 = arith.constant 0 : index
    %c0_27 = arith.constant 0 : index
    %c0_28 = arith.constant 0 : index
    %43 = vector.load %arg5[%c0_26, %c0_27, %c0_28] : memref<1x384x196xf32, #tpu.memory_space<vmem>>, vector<1x384x196xf32>
    %44 = vector.shape_cast %43 : vector<1x384x196xf32> to vector<384x196xf32>
    %45 = vector.shape_cast %42 : vector<384x196xf32> to vector<1x384x196xf32>
    tpu.vector_store %arg5[%c0_26, %c0_27, %c0_28], %45 {strides = array<i32>} : memref<1x384x196xf32, #tpu.memory_space<vmem>>, vector<1x384x196xf32>,
    return
  }
  func.func @transform_0(%arg0: i32) -> (i32, i32, i32) {
    %c0_i32 = arith.constant 0 : i32
    %c0_i32_0 = arith.constant 0 : i32
    %c0_i32_1 = arith.constant 0 : i32
    %c0_i32_2 = arith.constant 0 : i32
    return %c0_i32, %c0_i32_0, %c0_i32_1 : i32, i32, i32
  }
  func.func @transform_1(%arg0: i32) -> (i32, i32, i32) {
    %c0_i32 = arith.constant 0 : i32
    %c0_i32_0 = arith.constant 0 : i32
    %c0_i32_1 = arith.constant 0 : i32
    %c0_i32_2 = arith.constant 0 : i32
    return %c0_i32, %c0_i32_0, %c0_i32_1 : i32, i32, i32
  }
  func.func @transform_2(%arg0: i32) -> (i32, i32) {
    %c0_i32 = arith.constant 0 : i32
    %c0_i32_0 = arith.constant 0 : i32
    return %arg0, %c0_i32 : i32, i32
  }
  func.func @transform_3(%arg0: i32) -> (i32, i32) {
    %c0_i32 = arith.constant 0 : i32
    %c0_i32_0 = arith.constant 0 : i32
    return %arg0, %c0_i32 : i32, i32
  }
  func.func @transform_4(%arg0: i32) -> (i32, i32, i32) {
    %c0_i32 = arith.constant 0 : i32
    %c0_i32_0 = arith.constant 0 : i32
    %c0_i32_1 = arith.constant 0 : i32
    return %c0_i32, %arg0, %c0_i32_0 : i32, i32, i32
  }
}

</mosaic_0001>

<llo_original>
// kernel: tpu_custom_call.1
$region0: #{tpu_custom_call.1}
  #allocation0 [shape = 'u32[]', space=smem, size = 0x4, offset = 0x4, fixed_abs, tag = 'smem constant byte address 0x4 - core index']
  #allocation1 [shape = 'u32[144,128]{1,0:T(1,128)}', space=vmem, size = 0x12000, scoped, tag = 'internal scratch']
  #allocation2 [shape = 'f32[1,384,196]{2,1,0:T(8,128)}', space=vmem, size = 0x60000, scoped, tag = 'scratch operand']
  %s0 = inlined_call_operand.vmem [shape: f32[1,128,196], index: 0, kind: input, shape index: {}]
  %s1 = inlined_call_operand.vmem [shape: f32[1,128,196], index: 1, kind: input, shape index: {}]
  %s2 = inlined_call_operand.vmem [shape: f32[768,128], index: 2, kind: input, shape index: {}]
  %s3 = inlined_call_operand.vmem [shape: f32[768,2], index: 3, kind: input, shape index: {}]
  %s4 = inlined_call_operand.vmem [shape: f32[1,768,196], index: 4, kind: output, shape index: {}]
  %s5 = sld [smem:[#allocation0]]
  $region49: #{tpu_custom_call.1} parent=0
    _
  %s7 = ssub.s32 1, %s5
  %s8 = scalar_select 0, %s7, %s5
  loop: start=0, step=1, limit=4
  $region2: #{tpu_custom_call.1} parent=0 // loop_pre_header
    _
  $region3: #{tpu_custom_call.1} parent=0 // loop_header
    %s10 = sphi 0, %s14
    %p11 = scmp.ge.s32.totalorder %s10, 4
    %s18 = sphi 0, %s18
    %s20 = sphi 0, %s18
    %s21 = sphi 0, %s20
    %s35 = sphi 0, %s21
    %s39 = sphi 0, %s39
    %s41 = sphi 0, %s39
    %s42 = sphi 0, %s41
    %s56 = sphi 0, %s42
    %s62 = sphi 0, %s64
    %s65 = sphi 0, %s62
    %s66 = sphi 0, %s65
    %s82 = sphi 0, %s66
    %s88 = sphi 0, %s90
    %s91 = sphi 0, %s88
    %s92 = sphi 0, %s91
    %s108 = sphi 0, %s92
    %s114 = sphi 0, %s116
    %s117 = sphi 0, %s114
    %s118 = sphi 0, %s117
    %s134 = sphi 0, %s118
  $region4: #{tpu_custom_call.1} parent=0 // loop_header_branch
    %13 = sbr.rel (%p11) target = $region8
  $region5: #{tpu_custom_call.1} parent=0 // loop_body
    %s15 = ssub.s32 %s10, 1
    %s16 = ssub.s32 %s10, 2
    %s17 = sadd.s32 %s10, 1
    %s19 = sadd.s32 %s18, 1
    %p22 = scmp.eq.s32.totalorder %s10, 1
    %p23 = scmp.ne.s32.totalorder %s18, %s20
    %p24 = scmp.eq.s32.totalorder %s10, 0
    %p25 = por %p23, %p24
    %p26 = scmp.ne.s32.totalorder %s18, %s20
    %p27 = scmp.eq.s32.totalorder %s15, 1
    %p28 = por %p26, %p27
    %p29 = scmp.ne.s32.totalorder %s20, %s21
    %p30 = scmp.eq.s32.totalorder %s15, 0
    %p31 = por %p29, %p30
    %p32 = scmp.ne.s32.totalorder %s20, %s21
    %p33 = scmp.eq.s32.totalorder %s16, 1
    %p34 = por %p32, %p33
    %p36 = scmp.ne.s32.totalorder %s21, %s35
    %p37 = scmp.eq.s32.totalorder %s16, 0
    %p38 = por %p36, %p37
    %s40 = sadd.s32 %s39, 1
    %p43 = scmp.eq.s32.totalorder %s10, 1
    %p44 = scmp.ne.s32.totalorder %s39, %s41
    %p45 = scmp.eq.s32.totalorder %s10, 0
    %p46 = por %p44, %p45
    %p47 = scmp.ne.s32.totalorder %s39, %s41
    %p48 = scmp.eq.s32.totalorder %s15, 1
    %p49 = por %p47, %p48
    %p50 = scmp.ne.s32.totalorder %s41, %s42
    %p51 = scmp.eq.s32.totalorder %s15, 0
    %p52 = por %p50, %p51
    %p53 = scmp.ne.s32.totalorder %s41, %s42
    %p54 = scmp.eq.s32.totalorder %s16, 1
    %p55 = por %p53, %p54
    %p57 = scmp.ne.s32.totalorder %s42, %s56
    %p58 = scmp.eq.s32.totalorder %s16, 0
    %p59 = por %p57, %p58
    %s60 = ssub.s32 %s10, %s17
    %p61 = scmp.eq.s32.totalorder %s60, 0
    %s63 = sadd.s32 %s62, 1
    %s64 = scalar_select %p61, %s62, %s63
    %p67 = pneg %p61
    %p68 = scmp.eq.s32.totalorder %s10, 1
    %p69 = por %p67, %p68
    %p70 = scmp.ne.s32.totalorder %s62, %s65
    %p71 = scmp.eq.s32.totalorder %s10, 0
    %p72 = por %p70, %p71
    %p73 = scmp.ne.s32.totalorder %s62, %s65
    %p74 = scmp.eq.s32.totalorder %s15, 1
    %p75 = por %p73, %p74
    %p76 = scmp.ne.s32.totalorder %s65, %s66
    %p77 = scmp.eq.s32.totalorder %s15, 0
    %p78 = por %p76, %p77
    %p79 = scmp.ne.s32.totalorder %s65, %s66
    %p80 = scmp.eq.s32.totalorder %s16, 1
    %p81 = por %p79, %p80
    %p83 = scmp.ne.s32.totalorder %s66, %s82
    %p84 = scmp.eq.s32.totalorder %s16, 0
    %p85 = por %p83, %p84
    %s86 = ssub.s32 %s10, %s17
    %p87 = scmp.eq.s32.totalorder %s86, 0
    %s89 = sadd.s32 %s88, 1
    %s90 = scalar_select %p87, %s88, %s89
    %p93 = pneg %p87
    %p94 = scmp.eq.s32.totalorder %s10, 1
    %p95 = por %p93, %p94
    %p96 = scmp.ne.s32.totalorder %s88, %s91
    %p97 = scmp.eq.s32.totalorder %s10, 0
    %p98 = por %p96, %p97
    %p99 = scmp.ne.s32.totalorder %s88, %s91
    %p100 = scmp.eq.s32.totalorder %s15, 1
    %p101 = por %p99, %p100
    %p102 = scmp.ne.s32.totalorder %s91, %s92
    %p103 = scmp.eq.s32.totalorder %s15, 0
    %p104 = por %p102, %p103
    %p105 = scmp.ne.s32.totalorder %s91, %s92
    %p106 = scmp.eq.s32.totalorder %s16, 1
    %p107 = por %p105, %p106
    %p109 = scmp.ne.s32.totalorder %s92, %s108
    %p110 = scmp.eq.s32.totalorder %s16, 0
    %p111 = por %p109, %p110
    %s112 = ssub.s32 %s10, %s17
    %p113 = scmp.eq.s32.totalorder %s112, 0
    %s115 = sadd.s32 %s114, 1
    %s116 = scalar_select %p113, %s114, %s115
    %p119 = pneg %p113
    %p120 = scmp.eq.s32.totalorder %s10, 1
    %p121 = por %p119, %p120
    %p122 = scmp.ne.s32.totalorder %s114, %s117
    %p123 = scmp.eq.s32.totalorder %s10, 0
    %p124 = por %p122, %p123
    %p125 = scmp.ne.s32.totalorder %s114, %s117
    %p126 = scmp.eq.s32.totalorder %s15, 1
    %p127 = por %p125, %p126
    %p128 = scmp.ne.s32.totalorder %s117, %s118
    %p129 = scmp.eq.s32.totalorder %s15, 0
    %p130 = por %p128, %p129
    %p131 = scmp.ne.s32.totalorder %s117, %s118
    %p132 = scmp.eq.s32.totalorder %s16, 1
    %p133 = por %p131, %p132
    %p135 = scmp.ne.s32.totalorder %s118, %s134
    %p136 = scmp.eq.s32.totalorder %s16, 0
    %p137 = por %p135, %p136
    %p138 = scmp.le.s32.totalorder 1, %s10
    %p139 = scmp.lt.s32.totalorder %s10, 3
    %p140 = pnand %p138, %p139
    %p141 = pneg %p140
    // Predicated region
    $region9: #{tpu_custom_call.1} parent=5 // pred_check
      _
    $region10: #{tpu_custom_call.1} parent=5 // pred_check_branch
      %143 = sbr.rel (%p140) target = $region12
    $region11: #{tpu_custom_call.1} parent=5 // pred_region
      %s144 = ssub.s32 %s10, 1
      // Predicated region
      $region13: #{tpu_custom_call.1} parent=11 // pred_check
        %p145 = pneg %p31
      $region14: #{tpu_custom_call.1} parent=11 // pred_check_branch
        %147 = sbr.rel (%p145) target = $region16
      $region15: #{tpu_custom_call.1} parent=11 // pred_region
        _
      $region16: #{tpu_custom_call.1} parent=11 // pred_fallthru
        _
      // Predicated region
      $region17: #{tpu_custom_call.1} parent=11 // pred_check
        %p148 = pneg %p52
      $region18: #{tpu_custom_call.1} parent=11 // pred_check_branch
        %150 = sbr.rel (%p148) target = $region20
      $region19: #{tpu_custom_call.1} parent=11 // pred_region
        _
      $region20: #{tpu_custom_call.1} parent=11 // pred_fallthru
        _
    $region12: #{tpu_custom_call.1} parent=5 // pred_fallthru
      _
    %p151 = scmp.lt.s32.totalorder %s10, 2
    // Predicated region
    $region21: #{tpu_custom_call.1} parent=5 // pred_check
      %p152 = pneg %p151
    $region22: #{tpu_custom_call.1} parent=5 // pred_check_branch
      %154 = sbr.rel (%p152) target = $region24
    $region23: #{tpu_custom_call.1} parent=5 // pred_region
      // Predicated region
      $region25: #{tpu_custom_call.1} parent=23 // pred_check
        %p155 = pneg %p72
      $region26: #{tpu_custom_call.1} parent=23 // pred_check_branch
        %157 = sbr.rel (%p155) target = $region28
      $region27: #{tpu_custom_call.1} parent=23 // pred_region
        %s158 = smul.u32 48, %s10
        %p159 = scmp.lt.s32.totalorder %s158, 95
        %s160 = scalar_select %p159, %s158, 95
        %s161 = smul.addr %s160, 8
        %s162 = scalar_lea.vmem %s2, %s161
        %s163 = smul.u32 48, %s10
      $region28: #{tpu_custom_call.1} parent=23 // pred_fallthru
        _
      // Predicated region
      $region29: #{tpu_custom_call.1} parent=23 // pred_check
        %p164 = pneg %p98
      $region30: #{tpu_custom_call.1} parent=23 // pred_check_branch
        %166 = sbr.rel (%p164) target = $region32
      $region31: #{tpu_custom_call.1} parent=23 // pred_region
        %s167 = smul.u32 48, %s10
        %p168 = scmp.lt.s32.totalorder %s167, 95
        %s169 = scalar_select %p168, %s167, 95
        %s170 = smul.addr %s169, 8
        %s171 = scalar_lea.vmem %s3, %s170
        %s172 = smul.u32 48, %s10
      $region32: #{tpu_custom_call.1} parent=23 // pred_fallthru
        _
    $region24: #{tpu_custom_call.1} parent=5 // pred_fallthru
      _
    %p173 = scmp.le.s32.totalorder 1, %s10
    %p174 = scmp.lt.s32.totalorder %s10, 3
    %p175 = pnand %p173, %p174
    %p176 = pneg %p175
    // Predicated region
    $region33: #{tpu_custom_call.1} parent=5 // pred_check
      _
    $region34: #{tpu_custom_call.1} parent=5 // pred_check_branch
      %178 = sbr.rel (%p175) target = $region36
    $region35: #{tpu_custom_call.1} parent=5 // pred_region
      %s179 = ssub.s32 %s10, 1
      %p180 = pneg %p31
      %p181 = pneg %p28
      %p182 = pneg %p52
      %p183 = pneg %p49
      %s184 = smul.u32 48, %s15
      %p185 = scmp.lt.s32.totalorder %s184, 95
      %s186 = scalar_select %p185, %s184, 95
      %s187 = smul.addr %s186, 8
      %s188 = scalar_lea.vmem %s2, %s187
      %p189 = pneg %p78
      %p190 = pneg %p75
      %s191 = smul.u32 48, %s15
      %p192 = scmp.lt.s32.totalorder %s191, 95
      %s193 = scalar_select %p192, %s191, 95
      %s194 = smul.addr %s193, 8
      %s195 = scalar_lea.vmem %s3, %s194
      %p196 = pneg %p104
      %p197 = pneg %p101
      %p198 = pneg %p130
      %p199 = pneg %p127
      %s200 = smul.u32 48, %s15
      %p201 = scmp.lt.s32.totalorder %s200, 95
      %s202 = scalar_select %p201, %s200, 95
      %s203 = smul.addr %s202, 2
      %s204 = smul.addr %s203, 8
      %s205 = scalar_lea.vmem %s4, %s204
      %s206 = smul.u32 48, %s15
      %p207 = scmp.lt.s32.totalorder %s206, 95
      %s208 = scalar_select %p207, %s206, 95
      %s209 = smul.addr %s208, 8
      %s210 = scalar_lea.vmem %s2, %s209
      %s211 = smul.u32 48, %s15
      %s212 = smul.u32 48, %s15
      %p213 = scmp.lt.s32.totalorder %s212, 95
      %s214 = scalar_select %p213, %s212, 95
      %s215 = smul.addr %s214, 8
      %s216 = scalar_lea.vmem %s3, %s215
      %s217 = smul.u32 48, %s15
      %s218 = smul.u32 48, %s15
      %p219 = scmp.lt.s32.totalorder %s218, 95
      %s220 = scalar_select %p219, %s218, 95
      %s221 = smul.addr %s220, 2
      %s222 = smul.addr %s221, 8
      %s223 = scalar_lea.vmem %s4, %s222
      %s224 = smul.u32 48, %s15
      %v226 = vld [vmem:[%s210] sm:$0xff]
      %v227 = vld [vmem:[%s210 + $0x8] sm:$0xff]
      %v228 = vld [vmem:[%s210 + $0x10] sm:$0xff]
      %v229 = vld [vmem:[%s210 + $0x18] sm:$0xff]
      %v230 = vld [vmem:[%s210 + $0x20] sm:$0xff]
      %v231 = vld [vmem:[%s210 + $0x28] sm:$0xff]
      %v232 = vld [vmem:[%s210 + $0x30] sm:$0xff]
      %v233 = vld [vmem:[%s210 + $0x38] sm:$0xff]
      %v234 = vld [vmem:[%s210 + $0x40] sm:$0xff]
      %v235 = vld [vmem:[%s210 + $0x48] sm:$0xff]
      %v236 = vld [vmem:[%s210 + $0x50] sm:$0xff]
      %v237 = vld [vmem:[%s210 + $0x58] sm:$0xff]
      %v238 = vld [vmem:[%s210 + $0x60] sm:$0xff]
      %v239 = vld [vmem:[%s210 + $0x68] sm:$0xff]
      %v240 = vld [vmem:[%s210 + $0x70] sm:$0xff]
      %v241 = vld [vmem:[%s210 + $0x78] sm:$0xff]
      %v242 = vld [vmem:[%s210 + $0x80] sm:$0xff]
      %v243 = vld [vmem:[%s210 + $0x88] sm:$0xff]
      %v244 = vld [vmem:[%s210 + $0x90] sm:$0xff]
      %v245 = vld [vmem:[%s210 + $0x98] sm:$0xff]
      %v246 = vld [vmem:[%s210 + $0xa0] sm:$0xff]
      %v247 = vld [vmem:[%s210 + $0xa8] sm:$0xff]
      %v248 = vld [vmem:[%s210 + $0xb0] sm:$0xff]
      %v249 = vld [vmem:[%s210 + $0xb8] sm:$0xff]
      %v250 = vld [vmem:[%s210 + $0xc0] sm:$0xff]
      %v251 = vld [vmem:[%s210 + $0xc8] sm:$0xff]
      %v252 = vld [vmem:[%s210 + $0xd0] sm:$0xff]
      %v253 = vld [vmem:[%s210 + $0xd8] sm:$0xff]
      %v254 = vld [vmem:[%s210 + $0xe0] sm:$0xff]
      %v255 = vld [vmem:[%s210 + $0xe8] sm:$0xff]
      %v256 = vld [vmem:[%s210 + $0xf0] sm:$0xff]
      %v257 = vld [vmem:[%s210 + $0xf8] sm:$0xff]
      %v258 = vld [vmem:[%s210 + $0x100] sm:$0xff]
      %v259 = vld [vmem:[%s210 + $0x108] sm:$0xff]
      %v260 = vld [vmem:[%s210 + $0x110] sm:$0xff]
      %v261 = vld [vmem:[%s210 + $0x118] sm:$0xff]
      %v262 = vld [vmem:[%s210 + $0x120] sm:$0xff]
      %v263 = vld [vmem:[%s210 + $0x128] sm:$0xff]
      %v264 = vld [vmem:[%s210 + $0x130] sm:$0xff]
      %v265 = vld [vmem:[%s210 + $0x138] sm:$0xff]
      %v266 = vld [vmem:[%s210 + $0x140] sm:$0xff]
      %v267 = vld [vmem:[%s210 + $0x148] sm:$0xff]
      %v268 = vld [vmem:[%s210 + $0x150] sm:$0xff]
      %v269 = vld [vmem:[%s210 + $0x158] sm:$0xff]
      %v270 = vld [vmem:[%s210 + $0x160] sm:$0xff]
      %v271 = vld [vmem:[%s210 + $0x168] sm:$0xff]
      %v272 = vld [vmem:[%s210 + $0x170] sm:$0xff]
      %v273 = vld [vmem:[%s210 + $0x178] sm:$0xff]
      %v274 = vpack.c.bf16 %v227, %v226
      %v275 = vpack.c.bf16 %v229, %v228
      %v276 = vpack.c.bf16 %v231, %v230
      %v277 = vpack.c.bf16 %v233, %v232
      %v278 = vpack.c.bf16 %v235, %v234
      %v279 = vpack.c.bf16 %v237, %v236
      %v280 = vpack.c.bf16 %v239, %v238
      %v281 = vpack.c.bf16 %v241, %v240
      %v282 = vpack.c.bf16 %v243, %v242
      %v283 = vpack.c.bf16 %v245, %v244
      %v284 = vpack.c.bf16 %v247, %v246
      %v285 = vpack.c.bf16 %v249, %v248
      %v286 = vpack.c.bf16 %v251, %v250
      %v287 = vpack.c.bf16 %v253, %v252
      %v288 = vpack.c.bf16 %v255, %v254
      %v289 = vpack.c.bf16 %v257, %v256
      %v290 = vpack.c.bf16 %v259, %v258
      %v291 = vpack.c.bf16 %v261, %v260
      %v292 = vpack.c.bf16 %v263, %v262
      %v293 = vpack.c.bf16 %v265, %v264
      %v294 = vpack.c.bf16 %v267, %v266
      %v295 = vpack.c.bf16 %v269, %v268
      %v296 = vpack.c.bf16 %v271, %v270
      %v297 = vpack.c.bf16 %v273, %v272
      %v298 = vld [vmem:[%s0] sm:$0xff]
      %v299 = vld [vmem:[%s0 + $0x8] sm:$0xff]
      %v300 = vld [vmem:[%s0 + $0x10] sm:$0xff]
      %v301 = vld [vmem:[%s0 + $0x18] sm:$0xff]
      %v302 = vld [vmem:[%s0 + $0x20] sm:$0xff]
      %v303 = vld [vmem:[%s0 + $0x28] sm:$0xff]
      %v304 = vld [vmem:[%s0 + $0x30] sm:$0xff]
      %v305 = vld [vmem:[%s0 + $0x38] sm:$0xff]
      %v306 = vld [vmem:[%s0 + $0x40] sm:$0xff]
      %v307 = vld [vmem:[%s0 + $0x48] sm:$0xff]
      %v308 = vld [vmem:[%s0 + $0x50] sm:$0xff]
      %v309 = vld [vmem:[%s0 + $0x58] sm:$0xff]
      %v310 = vld [vmem:[%s0 + $0x60] sm:$0xff]
      %v311 = vld [vmem:[%s0 + $0x68] sm:$0xff]
      %v312 = vld [vmem:[%s0 + $0x70] sm:$0xff]
      %v313 = vld [vmem:[%s0 + $0x78] sm:$0xff]
      %v314 = vld [vmem:[%s0 + $0x80] sm:$0xff]
      %v315 = vld [vmem:[%s0 + $0x88] sm:$0xff]
      %v316 = vld [vmem:[%s0 + $0x90] sm:$0xff]
      %v317 = vld [vmem:[%s0 + $0x98] sm:$0xff]
      %v318 = vld [vmem:[%s0 + $0xa0] sm:$0xff]
      %v319 = vld [vmem:[%s0 + $0xa8] sm:$0xff]
      %v320 = vld [vmem:[%s0 + $0xb0] sm:$0xff]
      %v321 = vld [vmem:[%s0 + $0xb8] sm:$0xff]
      %v322 = vld [vmem:[%s0 + $0xc0] sm:$0xff]
      %v323 = vld [vmem:[%s0 + $0xc8] sm:$0xff]
      %v324 = vld [vmem:[%s0 + $0xd0] sm:$0xff]
      %v325 = vld [vmem:[%s0 + $0xd8] sm:$0xff]
      %v326 = vld [vmem:[%s0 + $0xe0] sm:$0xff]
      %v327 = vld [vmem:[%s0 + $0xe8] sm:$0xff]
      %v328 = vld [vmem:[%s0 + $0xf0] sm:$0xff]
      %v329 = vld [vmem:[%s0 + $0xf8] sm:$0xff]
      %v330 = vld [vmem:[%s1] sm:$0xff]
      %v331 = vld [vmem:[%s1 + $0x8] sm:$0xff]
      %v332 = vld [vmem:[%s1 + $0x10] sm:$0xff]
      %v333 = vld [vmem:[%s1 + $0x18] sm:$0xff]
      %v334 = vld [vmem:[%s1 + $0x20] sm:$0xff]
      %v335 = vld [vmem:[%s1 + $0x28] sm:$0xff]
      %v336 = vld [vmem:[%s1 + $0x30] sm:$0xff]
      %v337 = vld [vmem:[%s1 + $0x38] sm:$0xff]
      %v338 = vld [vmem:[%s1 + $0x40] sm:$0xff]
      %v339 = vld [vmem:[%s1 + $0x48] sm:$0xff]
      %v340 = vld [vmem:[%s1 + $0x50] sm:$0xff]
      %v341 = vld [vmem:[%s1 + $0x58] sm:$0xff]
      %v342 = vld [vmem:[%s1 + $0x60] sm:$0xff]
      %v343 = vld [vmem:[%s1 + $0x68] sm:$0xff]
      %v344 = vld [vmem:[%s1 + $0x70] sm:$0xff]
      %v345 = vld [vmem:[%s1 + $0x78] sm:$0xff]
      %v346 = vld [vmem:[%s1 + $0x80] sm:$0xff]
      %v347 = vld [vmem:[%s1 + $0x88] sm:$0xff]
      %v348 = vld [vmem:[%s1 + $0x90] sm:$0xff]
      %v349 = vld [vmem:[%s1 + $0x98] sm:$0xff]
      %v350 = vld [vmem:[%s1 + $0xa0] sm:$0xff]
      %v351 = vld [vmem:[%s1 + $0xa8] sm:$0xff]
      %v352 = vld [vmem:[%s1 + $0xb0] sm:$0xff]
      %v353 = vld [vmem:[%s1 + $0xb8] sm:$0xff]
      %v354 = vld [vmem:[%s1 + $0xc0] sm:$0xff]
      %v355 = vld [vmem:[%s1 + $0xc8] sm:$0xff]
      %v356 = vld [vmem:[%s1 + $0xd0] sm:$0xff]
      %v357 = vld [vmem:[%s1 + $0xd8] sm:$0xff]
      %v358 = vld [vmem:[%s1 + $0xe0] sm:$0xff]
      %v359 = vld [vmem:[%s1 + $0xe8] sm:$0xff]
      %v360 = vld [vmem:[%s1 + $0xf0] sm:$0xff]
      %v361 = vld [vmem:[%s1 + $0xf8] sm:$0xff]
      %v362 = vadd.f32 %v298, %v330
      %v363 = vadd.f32 %v299, %v331
      %v364 = vadd.f32 %v300, %v332
      %v365 = vadd.f32 %v301, %v333
      %v366 = vadd.f32 %v302, %v334
      %v367 = vadd.f32 %v303, %v335
      %v368 = vadd.f32 %v304, %v336
      %v369 = vadd.f32 %v305, %v337
      %v370 = vadd.f32 %v306, %v338
      %v371 = vadd.f32 %v307, %v339
      %v372 = vadd.f32 %v308, %v340
      %v373 = vadd.f32 %v309, %v341
      %v374 = vadd.f32 %v310, %v342
      %v375 = vadd.f32 %v311, %v343
      %v376 = vadd.f32 %v312, %v344
      %v377 = vadd.f32 %v313, %v345
      %v378 = vadd.f32 %v314, %v346
      %v379 = vadd.f32 %v315, %v347
      %v380 = vadd.f32 %v316, %v348
      %v381 = vadd.f32 %v317, %v349
      %v382 = vadd.f32 %v318, %v350
      %v383 = vadd.f32 %v319, %v351
      %v384 = vadd.f32 %v320, %v352
      %v385 = vadd.f32 %v321, %v353
      %v386 = vadd.f32 %v322, %v354
      %v387 = vadd.f32 %v323, %v355
      %v388 = vadd.f32 %v324, %v356
      %v389 = vadd.f32 %v325, %v357
      %v390 = vadd.f32 %v326, %v358
      %v391 = vadd.f32 %v327, %v359
      %v392 = vadd.f32 %v328, %v360
      %v393 = vadd.f32 %v329, %v361
      %v394 = vpack.c.bf16 %v364, %v362
      %v395 = vpack.c.bf16 %v365, %v363
      %v396 = vpack.c.bf16 %v368, %v366
      %v397 = vpack.c.bf16 %v369, %v367
      %v398 = vpack.c.bf16 %v372, %v370
      %v399 = vpack.c.bf16 %v373, %v371
      %v400 = vpack.c.bf16 %v376, %v374
      %v401 = vpack.c.bf16 %v377, %v375
      %v402 = vpack.c.bf16 %v380, %v378
      %v403 = vpack.c.bf16 %v381, %v379
      %v404 = vpack.c.bf16 %v384, %v382
      %v405 = vpack.c.bf16 %v385, %v383
      %v406 = vpack.c.bf16 %v388, %v386
      %v407 = vpack.c.bf16 %v389, %v387
      %v408 = vpack.c.bf16 %v392, %v390
      %v409 = vpack.c.bf16 %v393, %v391
      %410 = vmatprep.subr.bf16.mxu0 %v395
      %411 = vmatpush1.bf16.msra.mxu0 %v394
      %412 = vmatprep.subr.bf16.mxu0 %v397
      %413 = vmatpush1.bf16.msra.mxu0 %v396
      %414 = vmatprep.subr.bf16.mxu0 %v399
      %415 = vmatpush1.bf16.msra.mxu0 %v398
      %416 = vmatprep.subr.bf16.mxu0 %v401
      %417 = vmatpush1.bf16.msra.mxu0 %v400
      %418 = vmatprep.subr.bf16.mxu0 %v403
      %419 = vmatpush1.bf16.msra.mxu0 %v402
      %420 = vmatprep.subr.bf16.mxu0 %v405
      %421 = vmatpush1.bf16.msra.mxu0 %v404
      %422 = vmatprep.subr.bf16.mxu0 %v407
      %423 = vmatpush1.bf16.msra.mxu0 %v406
      %424 = vmatprep.subr.bf16.mxu0 %v409
      %425 = vmatpush1.bf16.msra.mxu0 %v408
      %426 = vmatprep.subr.bf16.mxu0 0
      %427 = vmatpush1.bf16.msra.mxu0 0
      %428 = vmatprep.subr.bf16.mxu0 0
      %429 = vmatpush1.bf16.msra.mxu0 0
      %430 = vmatprep.subr.bf16.mxu0 0
      %431 = vmatpush1.bf16.msra.mxu0 0
      %432 = vmatprep.subr.bf16.mxu0 0
      %433 = vmatpush1.bf16.msra.mxu0 0
      %434 = vmatprep.subr.bf16.mxu0 0
      %435 = vmatpush1.bf16.msra.mxu0 0
      %436 = vmatprep.subr.bf16.mxu0 0
      %437 = vmatpush1.bf16.msra.mxu0 0
      %438 = vmatprep.subr.bf16.mxu0 0
      %439 = vmatpush1.bf16.msra.mxu0 0
      %440 = vmatprep.subr.bf16.mxu0 0
      %441 = vmatpush1.bf16.msra.mxu0 0
      %442 = vmatprep.mubr.bf16.mxu0 0
      %443 = vmatmul.mubr.bf16.gmra.mrb[0].mxu0 %v274
      %v444 = vpop.f32.mrb[0].mxu0
      %v445 = vadd.f32 0.0, %v444
      %v446 = vpop.f32.mrb[0].mxu0
      %v447 = vadd.f32 0.0, %v446
      %v448 = vpop.f32.mrb[0].mxu0
      %v449 = vadd.f32 0.0, %v448
      %v450 = vpop.f32.mrb[0].mxu0
      %v451 = vadd.f32 0.0, %v450
      %452 = vmatprep.mubr.bf16.mxu0 0
      %453 = vmatmul.mubr.bf16.gmra.mrb[0].mxu0 %v275
      %v454 = vpop.f32.mrb[0].mxu0
      %v455 = vadd.f32 0.0, %v454
      %v456 = vpop.f32.mrb[0].mxu0
      %v457 = vadd.f32 0.0, %v456
      %v458 = vpop.f32.mrb[0].mxu0
      %v459 = vadd.f32 0.0, %v458
      %v460 = vpop.f32.mrb[0].mxu0
      %v461 = vadd.f32 0.0, %v460
      %462 = vmatprep.mubr.bf16.mxu0 0
      %463 = vmatmul.mubr.bf16.gmra.mrb[0].mxu0 %v276
      %v464 = vpop.f32.mrb[0].mxu0
      %v465 = vadd.f32 0.0, %v464
      %v466 = vpop.f32.mrb[0].mxu0
      %v467 = vadd.f32 0.0, %v466
      %v468 = vpop.f32.mrb[0].mxu0
      %v469 = vadd.f32 0.0, %v468
      %v470 = vpop.f32.mrb[0].mxu0
      %v471 = vadd.f32 0.0, %v470
      %472 = vmatprep.mubr.bf16.mxu0 0
      %473 = vmatmul.mubr.bf16.gmra.mrb[0].mxu0 %v277
      %v474 = vpop.f32.mrb[0].mxu0
      %v475 = vadd.f32 0.0, %v474
      %v476 = vpop.f32.mrb[0].mxu0
      %v477 = vadd.f32 0.0, %v476
      %v478 = vpop.f32.mrb[0].mxu0
      %v479 = vadd.f32 0.0, %v478
      %v480 = vpop.f32.mrb[0].mxu0
      %v481 = vadd.f32 0.0, %v480
      %482 = vmatprep.mubr.bf16.mxu0 0
      %483 = vmatmul.mubr.bf16.gmra.mrb[0].mxu0 %v278
      %v484 = vpop.f32.mrb[0].mxu0
      %v485 = vadd.f32 0.0, %v484
      %v486 = vpop.f32.mrb[0].mxu0
      %v487 = vadd.f32 0.0, %v486
      %v488 = vpop.f32.mrb[0].mxu0
      %v489 = vadd.f32 0.0, %v488
      %v490 = vpop.f32.mrb[0].mxu0
      %v491 = vadd.f32 0.0, %v490
      %492 = vmatprep.mubr.bf16.mxu0 0
      %493 = vmatmul.mubr.bf16.gmra.mrb[0].mxu0 %v279
      %v494 = vpop.f32.mrb[0].mxu0
      %v495 = vadd.f32 0.0, %v494
      %v496 = vpop.f32.mrb[0].mxu0
      %v497 = vadd.f32 0.0, %v496
      %v498 = vpop.f32.mrb[0].mxu0
      %v499 = vadd.f32 0.0, %v498
      %v500 = vpop.f32.mrb[0].mxu0
      %v501 = vadd.f32 0.0, %v500
      %502 = vmatprep.mubr.bf16.mxu0 0
      %503 = vmatmul.mubr.bf16.gmra.mrb[0].mxu0 %v280
      %v504 = vpop.f32.mrb[0].mxu0
      %v505 = vadd.f32 0.0, %v504
      %v506 = vpop.f32.mrb[0].mxu0
      %v507 = vadd.f32 0.0, %v506
      %v508 = vpop.f32.mrb[0].mxu0
      %v509 = vadd.f32 0.0, %v508
      %v510 = vpop.f32.mrb[0].mxu0
      %v511 = vadd.f32 0.0, %v510
      %512 = vmatprep.mubr.bf16.mxu0 0
      %513 = vmatmul.mubr.bf16.gmra.mrb[0].mxu0 %v281
      %v514 = vpop.f32.mrb[0].mxu0
      %v515 = vadd.f32 0.0, %v514
      %v516 = vpop.f32.mrb[0].mxu0
      %v517 = vadd.f32 0.0, %v516
      %v518 = vpop.f32.mrb[0].mxu0
      %v519 = vadd.f32 0.0, %v518
      %v520 = vpop.f32.mrb[0].mxu0
      %v521 = vadd.f32 0.0, %v520
      %522 = vmatprep.mubr.bf16.mxu0 0
      %523 = vmatmul.mubr.bf16.gmra.mrb[0].mxu0 %v282
      %v524 = vpop.f32.mrb[0].mxu0
      %v525 = vadd.f32 0.0, %v524
      %v526 = vpop.f32.mrb[0].mxu0
      %v527 = vadd.f32 0.0, %v526
      %v528 = vpop.f32.mrb[0].mxu0
      %v529 = vadd.f32 0.0, %v528
      %v530 = vpop.f32.mrb[0].mxu0
      %v531 = vadd.f32 0.0, %v530
      %532 = vmatprep.mubr.bf16.mxu0 0
      %533 = vmatmul.mubr.bf16.gmra.mrb[0].mxu0 %v283
      %v534 = vpop.f32.mrb[0].mxu0
      %v535 = vadd.f32 0.0, %v534
      %v536 = vpop.f32.mrb[0].mxu0
      %v537 = vadd.f32 0.0, %v536
      %v538 = vpop.f32.mrb[0].mxu0
      %v539 = vadd.f32 0.0, %v538
      %v540 = vpop.f32.mrb[0].mxu0
      %v541 = vadd.f32 0.0, %v540
      %542 = vmatprep.mubr.bf16.mxu0 0
      %543 = vmatmul.mubr.bf16.gmra.mrb[0].mxu0 %v284
      %v544 = vpop.f32.mrb[0].mxu0
      %v545 = vadd.f32 0.0, %v544
      %v546 = vpop.f32.mrb[0].mxu0
      %v547 = vadd.f32 0.0, %v546
      %v548 = vpop.f32.mrb[0].mxu0
      %v549 = vadd.f32 0.0, %v548
      %v550 = vpop.f32.mrb[0].mxu0
      %v551 = vadd.f32 0.0, %v550
      %552 = vmatprep.mubr.bf16.mxu0 0
      %553 = vmatmul.mubr.bf16.gmra.mrb[0].mxu0 %v285
      %v554 = vpop.f32.mrb[0].mxu0
      %v555 = vadd.f32 0.0, %v554
      %v556 = vpop.f32.mrb[0].mxu0
      %v557 = vadd.f32 0.0, %v556
      %v558 = vpop.f32.mrb[0].mxu0
      %v559 = vadd.f32 0.0, %v558
      %v560 = vpop.f32.mrb[0].mxu0
      %v561 = vadd.f32 0.0, %v560
      %562 = vmatprep.mubr.bf16.mxu0 0
      %563 = vmatmul.mubr.bf16.gmra.mrb[0].mxu0 %v286
      %v564 = vpop.f32.mrb[0].mxu0
      %v565 = vadd.f32 0.0, %v564
      %v566 = vpop.f32.mrb[0].mxu0
      %v567 = vadd.f32 0.0, %v566
      %v568 = vpop.f32.mrb[0].mxu0
      %v569 = vadd.f32 0.0, %v568
      %v570 = vpop.f32.mrb[0].mxu0
      %v571 = vadd.f32 0.0, %v570
      %572 = vmatprep.mubr.bf16.mxu0 0
      %573 = vmatmul.mubr.bf16.gmra.mrb[0].mxu0 %v287
      %v574 = vpop.f32.mrb[0].mxu0
      %v575 = vadd.f32 0.0, %v574
      %v576 = vpop.f32.mrb[0].mxu0
      %v577 = vadd.f32 0.0, %v576
      %v578 = vpop.f32.mrb[0].mxu0
      %v579 = vadd.f32 0.0, %v578
      %v580 = vpop.f32.mrb[0].mxu0
      %v581 = vadd.f32 0.0, %v580
      %582 = vmatprep.mubr.bf16.mxu0 0
      %583 = vmatmul.mubr.bf16.gmra.mrb[0].mxu0 %v288
      %v584 = vpop.f32.mrb[0].mxu0
      %v585 = vadd.f32 0.0, %v584
      %v586 = vpop.f32.mrb[0].mxu0
      %v587 = vadd.f32 0.0, %v586
      %v588 = vpop.f32.mrb[0].mxu0
      %v589 = vadd.f32 0.0, %v588
      %v590 = vpop.f32.mrb[0].mxu0
      %v591 = vadd.f32 0.0, %v590
      %592 = vmatprep.mubr.bf16.mxu0 0
      %593 = vmatmul.mubr.bf16.gmra.mrb[0].mxu0 %v289
      %v594 = vpop.f32.mrb[0].mxu0
      %v595 = vadd.f32 0.0, %v594
      %v596 = vpop.f32.mrb[0].mxu0
      %v597 = vadd.f32 0.0, %v596
      %v598 = vpop.f32.mrb[0].mxu0
      %v599 = vadd.f32 0.0, %v598
      %v600 = vpop.f32.mrb[0].mxu0
      %v601 = vadd.f32 0.0, %v600
      %602 = vmatprep.mubr.bf16.mxu0 0
      %603 = vmatmul.mubr.bf16.gmra.mrb[0].mxu0 %v290
      %v604 = vpop.f32.mrb[0].mxu0
      %v605 = vadd.f32 0.0, %v604
      %v606 = vpop.f32.mrb[0].mxu0
      %v607 = vadd.f32 0.0, %v606
      %v608 = vpop.f32.mrb[0].mxu0
      %v609 = vadd.f32 0.0, %v608
      %v610 = vpop.f32.mrb[0].mxu0
      %v611 = vadd.f32 0.0, %v610
      %612 = vmatprep.mubr.bf16.mxu0 0
      %613 = vmatmul.mubr.bf16.gmra.mrb[0].mxu0 %v291
      %v614 = vpop.f32.mrb[0].mxu0
      %v615 = vadd.f32 0.0, %v614
      %v616 = vpop.f32.mrb[0].mxu0
      %v617 = vadd.f32 0.0, %v616
      %v618 = vpop.f32.mrb[0].mxu0
      %v619 = vadd.f32 0.0, %v618
      %v620 = vpop.f32.mrb[0].mxu0
      %v621 = vadd.f32 0.0, %v620
      %622 = vmatprep.mubr.bf16.mxu0 0
      %623 = vmatmul.mubr.bf16.gmra.mrb[0].mxu0 %v292
      %v624 = vpop.f32.mrb[0].mxu0
      %v625 = vadd.f32 0.0, %v624
      %v626 = vpop.f32.mrb[0].mxu0
      %v627 = vadd.f32 0.0, %v626
      %v628 = vpop.f32.mrb[0].mxu0
      %v629 = vadd.f32 0.0, %v628
      %v630 = vpop.f32.mrb[0].mxu0
      %v631 = vadd.f32 0.0, %v630
      %632 = vmatprep.mubr.bf16.mxu0 0
      %633 = vmatmul.mubr.bf16.gmra.mrb[0].mxu0 %v293
      %v634 = vpop.f32.mrb[0].mxu0
      %v635 = vadd.f32 0.0, %v634
      %v636 = vpop.f32.mrb[0].mxu0
      %v637 = vadd.f32 0.0, %v636
      %v638 = vpop.f32.mrb[0].mxu0
      %v639 = vadd.f32 0.0, %v638
      %v640 = vpop.f32.mrb[0].mxu0
      %v641 = vadd.f32 0.0, %v640
      %642 = vmatprep.mubr.bf16.mxu0 0
      %643 = vmatmul.mubr.bf16.gmra.mrb[0].mxu0 %v294
      %v644 = vpop.f32.mrb[0].mxu0
      %v645 = vadd.f32 0.0, %v644
      %v646 = vpop.f32.mrb[0].mxu0
      %v647 = vadd.f32 0.0, %v646
      %v648 = vpop.f32.mrb[0].mxu0
      %v649 = vadd.f32 0.0, %v648
      %v650 = vpop.f32.mrb[0].mxu0
      %v651 = vadd.f32 0.0, %v650
      %652 = vmatprep.mubr.bf16.mxu0 0
      %653 = vmatmul.mubr.bf16.gmra.mrb[0].mxu0 %v295
      %v654 = vpop.f32.mrb[0].mxu0
      %v655 = vadd.f32 0.0, %v654
      %v656 = vpop.f32.mrb[0].mxu0
      %v657 = vadd.f32 0.0, %v656
      %v658 = vpop.f32.mrb[0].mxu0
      %v659 = vadd.f32 0.0, %v658
      %v660 = vpop.f32.mrb[0].mxu0
      %v661 = vadd.f32 0.0, %v660
      %662 = vmatprep.mubr.bf16.mxu0 0
      %663 = vmatmul.mubr.bf16.gmra.mrb[0].mxu0 %v296
      %v664 = vpop.f32.mrb[0].mxu0
      %v665 = vadd.f32 0.0, %v664
      %v666 = vpop.f32.mrb[0].mxu0
      %v667 = vadd.f32 0.0, %v666
      %v668 = vpop.f32.mrb[0].mxu0
      %v669 = vadd.f32 0.0, %v668
      %v670 = vpop.f32.mrb[0].mxu0
      %v671 = vadd.f32 0.0, %v670
      %672 = vmatprep.mubr.bf16.mxu0 0
      %673 = vmatmul.mubr.bf16.gmra.mrb[0].mxu0 %v297
      %v674 = vpop.f32.mrb[0].mxu0
      %v675 = vadd.f32 0.0, %v674
      %v676 = vpop.f32.mrb[0].mxu0
      %v677 = vadd.f32 0.0, %v676
      %v678 = vpop.f32.mrb[0].mxu0
      %v679 = vadd.f32 0.0, %v678
      %v680 = vpop.f32.mrb[0].mxu0
      %v681 = vadd.f32 0.0, %v680
      %682 = vdwg.mxu0
      %683 = vst [vmem:[#allocation2] sm:$0xff] %v445
      %vm684 = vcmask 556032
      %685 = vst.msk [vmem:[#allocation2 + $0x8] sm:$0xff] %vm684, %v447
      %686 = vst [vmem:[#allocation2 + $0x10] sm:$0xff] %v449
      %687 = vst.msk [vmem:[#allocation2 + $0x18] sm:$0xff] %vm684, %v451
      %688 = vst [vmem:[#allocation2 + $0x20] sm:$0xff] %v455
      %689 = vst.msk [vmem:[#allocation2 + $0x28] sm:$0xff] %vm684, %v457
      %690 = vst [vmem:[#allocation2 + $0x30] sm:$0xff] %v459
      %691 = vst.msk [vmem:[#allocation2 + $0x38] sm:$0xff] %vm684, %v461
      %692 = vst [vmem:[#allocation2 + $0x40] sm:$0xff] %v465
      %693 = vst.msk [vmem:[#allocation2 + $0x48] sm:$0xff] %vm684, %v467
      %694 = vst [vmem:[#allocation2 + $0x50] sm:$0xff] %v469
      %695 = vst.msk [vmem:[#allocation2 + $0x58] sm:$0xff] %vm684, %v471
      %696 = vst [vmem:[#allocation2 + $0x60] sm:$0xff] %v475
      %697 = vst.msk [vmem:[#allocation2 + $0x68] sm:$0xff] %vm684, %v477
      %698 = vst [vmem:[#allocation2 + $0x70] sm:$0xff] %v479
      %699 = vst.msk [vmem:[#allocation2 + $0x78] sm:$0xff] %vm684, %v481
      %700 = vst [vmem:[#allocation2 + $0x80] sm:$0xff] %v485
      %701 = vst.msk [vmem:[#allocation2 + $0x88] sm:$0xff] %vm684, %v487
      %702 = vst [vmem:[#allocation2 + $0x90] sm:$0xff] %v489
      %703 = vst.msk [vmem:[#allocation2 + $0x98] sm:$0xff] %vm684, %v491
      %704 = vst [vmem:[#allocation2 + $0xa0] sm:$0xff] %v495
      %705 = vst.msk [vmem:[#allocation2 + $0xa8] sm:$0xff] %vm684, %v497
      %706 = vst [vmem:[#allocation2 + $0xb0] sm:$0xff] %v499
      %707 = vst.msk [vmem:[#allocation2 + $0xb8] sm:$0xff] %vm684, %v501
      %708 = vst [vmem:[#allocation2 + $0xc0] sm:$0xff] %v505
      %709 = vst.msk [vmem:[#allocation2 + $0xc8] sm:$0xff] %vm684, %v507
      %710 = vst [vmem:[#allocation2 + $0xd0] sm:$0xff] %v509
      %711 = vst.msk [vmem:[#allocation2 + $0xd8] sm:$0xff] %vm684, %v511
      %712 = vst [vmem:[#allocation2 + $0xe0] sm:$0xff] %v515
      %713 = vst.msk [vmem:[#allocation2 + $0xe8] sm:$0xff] %vm684, %v517
      %714 = vst [vmem:[#allocation2 + $0xf0] sm:$0xff] %v519
      %715 = vst.msk [vmem:[#allocation2 + $0xf8] sm:$0xff] %vm684, %v521
      %716 = vst [vmem:[#allocation2 + $0x100] sm:$0xff] %v525
      %717 = vst.msk [vmem:[#allocation2 + $0x108] sm:$0xff] %vm684, %v527
      %718 = vst [vmem:[#allocation2 + $0x110] sm:$0xff] %v529
      %719 = vst.msk [vmem:[#allocation2 + $0x118] sm:$0xff] %vm684, %v531
      %720 = vst [vmem:[#allocation2 + $0x120] sm:$0xff] %v535
      %721 = vst.msk [vmem:[#allocation2 + $0x128] sm:$0xff] %vm684, %v537
      %722 = vst [vmem:[#allocation2 + $0x130] sm:$0xff] %v539
      %723 = vst.msk [vmem:[#allocation2 + $0x138] sm:$0xff] %vm684, %v541
      %724 = vst [vmem:[#allocation2 + $0x140] sm:$0xff] %v545
      %725 = vst.msk [vmem:[#allocation2 + $0x148] sm:$0xff] %vm684, %v547
      %726 = vst [vmem:[#allocation2 + $0x150] sm:$0xff] %v549
      %727 = vst.msk [vmem:[#allocation2 + $0x158] sm:$0xff] %vm684, %v551
      %728 = vst [vmem:[#allocation2 + $0x160] sm:$0xff] %v555
      %729 = vst.msk [vmem:[#allocation2 + $0x168] sm:$0xff] %vm684, %v557
      %730 = vst [vmem:[#allocation2 + $0x170] sm:$0xff] %v559
      %731 = vst.msk [vmem:[#allocation2 + $0x178] sm:$0xff] %vm684, %v561
      %732 = vst [vmem:[#allocation2 + $0x180] sm:$0xff] %v565
      %733 = vst.msk [vmem:[#allocation2 + $0x188] sm:$0xff] %vm684, %v567
      %734 = vst [vmem:[#allocation2 + $0x190] sm:$0xff] %v569
      %735 = vst.msk [vmem:[#allocation2 + $0x198] sm:$0xff] %vm684, %v571
      %736 = vst [vmem:[#allocation2 + $0x1a0] sm:$0xff] %v575
      %737 = vst.msk [vmem:[#allocation2 + $0x1a8] sm:$0xff] %vm684, %v577
      %738 = vst [vmem:[#allocation2 + $0x1b0] sm:$0xff] %v579
      %739 = vst.msk [vmem:[#allocation2 + $0x1b8] sm:$0xff] %vm684, %v581
      %740 = vst [vmem:[#allocation2 + $0x1c0] sm:$0xff] %v585
      %741 = vst.msk [vmem:[#allocation2 + $0x1c8] sm:$0xff] %vm684, %v587
      %742 = vst [vmem:[#allocation2 + $0x1d0] sm:$0xff] %v589
      %743 = vst.msk [vmem:[#allocation2 + $0x1d8] sm:$0xff] %vm684, %v591
      %744 = vst [vmem:[#allocation2 + $0x1e0] sm:$0xff] %v595
      %745 = vst.msk [vmem:[#allocation2 + $0x1e8] sm:$0xff] %vm684, %v597
      %746 = vst [vmem:[#allocation2 + $0x1f0] sm:$0xff] %v599
      %747 = vst.msk [vmem:[#allocation2 + $0x1f8] sm:$0xff] %vm684, %v601
      %748 = vst [vmem:[#allocation2 + $0x200] sm:$0xff] %v605
      %749 = vst.msk [vmem:[#allocation2 + $0x208] sm:$0xff] %vm684, %v607
      %750 = vst [vmem:[#allocation2 + $0x210] sm:$0xff] %v609
      %751 = vst.msk [vmem:[#allocation2 + $0x218] sm:$0xff] %vm684, %v611
      %752 = vst [vmem:[#allocation2 + $0x220] sm:$0xff] %v615
      %753 = vst.msk [vmem:[#allocation2 + $0x228] sm:$0xff] %vm684, %v617
      %754 = vst [vmem:[#allocation2 + $0x230] sm:$0xff] %v619
      %755 = vst.msk [vmem:[#allocation2 + $0x238] sm:$0xff] %vm684, %v621
      %756 = vst [vmem:[#allocation2 + $0x240] sm:$0xff] %v625
      %757 = vst.msk [vmem:[#allocation2 + $0x248] sm:$0xff] %vm684, %v627
      %758 = vst [vmem:[#allocation2 + $0x250] sm:$0xff] %v629
      %759 = vst.msk [vmem:[#allocation2 + $0x258] sm:$0xff] %vm684, %v631
      %760 = vst [vmem:[#allocation2 + $0x260] sm:$0xff] %v635
      %761 = vst.msk [vmem:[#allocation2 + $0x268] sm:$0xff] %vm684, %v637
      %762 = vst [vmem:[#allocation2 + $0x270] sm:$0xff] %v639
      %763 = vst.msk [vmem:[#allocation2 + $0x278] sm:$0xff] %vm684, %v641
      %764 = vst [vmem:[#allocation2 + $0x280] sm:$0xff] %v645
      %765 = vst.msk [vmem:[#allocation2 + $0x288] sm:$0xff] %vm684, %v647
      %766 = vst [vmem:[#allocation2 + $0x290] sm:$0xff] %v649
      %767 = vst.msk [vmem:[#allocation2 + $0x298] sm:$0xff] %vm684, %v651
      %768 = vst [vmem:[#allocation2 + $0x2a0] sm:$0xff] %v655
      %769 = vst.msk [vmem:[#allocation2 + $0x2a8] sm:$0xff] %vm684, %v657
      %770 = vst [vmem:[#allocation2 + $0x2b0] sm:$0xff] %v659
      %771 = vst.msk [vmem:[#allocation2 + $0x2b8] sm:$0xff] %vm684, %v661
      %772 = vst [vmem:[#allocation2 + $0x2c0] sm:$0xff] %v665
      %773 = vst.msk [vmem:[#allocation2 + $0x2c8] sm:$0xff] %vm684, %v667
      %774 = vst [vmem:[#allocation2 + $0x2d0] sm:$0xff] %v669
      %775 = vst.msk [vmem:[#allocation2 + $0x2d8] sm:$0xff] %vm684, %v671
      %776 = vst [vmem:[#allocation2 + $0x2e0] sm:$0xff] %v675
      %777 = vst.msk [vmem:[#allocation2 + $0x2e8] sm:$0xff] %vm684, %v677
      %778 = vst [vmem:[#allocation2 + $0x2f0] sm:$0xff] %v679
      %779 = vst.msk [vmem:[#allocation2 + $0x2f8] sm:$0xff] %vm684, %v681
      %v780 = vsel %vm684, %v447, 0.0
      %v781 = vadd.f32 %v445, %v780
      %782 = vadd.xlane.f32.xlu0 %v781
      %v783 = vpop.xlane.xlu0 %782
      %v784 = vsel %vm684, %v451, 0.0
      %v785 = vadd.f32 %v449, %v784
      %786 = vadd.xlane.f32.xlu0 %v785
      %v787 = vpop.xlane.xlu0 %786
      %v788 = vsel %vm684, %v457, 0.0
      %v789 = vadd.f32 %v455, %v788
      %790 = vadd.xlane.f32.xlu0 %v789
      %v791 = vpop.xlane.xlu0 %790
      %v792 = vsel %vm684, %v461, 0.0
      %v793 = vadd.f32 %v459, %v792
      %794 = vadd.xlane.f32.xlu0 %v793
      %v795 = vpop.xlane.xlu0 %794
      %v796 = vsel %vm684, %v467, 0.0
      %v797 = vadd.f32 %v465, %v796
      %798 = vadd.xlane.f32.xlu0 %v797
      %v799 = vpop.xlane.xlu0 %798
      %v800 = vsel %vm684, %v471, 0.0
      %v801 = vadd.f32 %v469, %v800
      %802 = vadd.xlane.f32.xlu0 %v801
      %v803 = vpop.xlane.xlu0 %802
      %v804 = vsel %vm684, %v477, 0.0
      %v805 = vadd.f32 %v475, %v804
      %806 = vadd.xlane.f32.xlu0 %v805
      %v807 = vpop.xlane.xlu0 %806
      %v808 = vsel %vm684, %v481, 0.0
      %v809 = vadd.f32 %v479, %v808
      %810 = vadd.xlane.f32.xlu0 %v809
      %v811 = vpop.xlane.xlu0 %810
      %v812 = vsel %vm684, %v487, 0.0
      %v813 = vadd.f32 %v485, %v812
      %814 = vadd.xlane.f32.xlu0 %v813
      %v815 = vpop.xlane.xlu0 %814
      %v816 = vsel %vm684, %v491, 0.0
      %v817 = vadd.f32 %v489, %v816
      %818 = vadd.xlane.f32.xlu0 %v817
      %v819 = vpop.xlane.xlu0 %818
      %v820 = vsel %vm684, %v497, 0.0
      %v821 = vadd.f32 %v495, %v820
      %822 = vadd.xlane.f32.xlu0 %v821
      %v823 = vpop.xlane.xlu0 %822
      %v824 = vsel %vm684, %v501, 0.0
      %v825 = vadd.f32 %v499, %v824
      %826 = vadd.xlane.f32.xlu0 %v825
      %v827 = vpop.xlane.xlu0 %826
      %v828 = vsel %vm684, %v507, 0.0
      %v829 = vadd.f32 %v505, %v828
      %830 = vadd.xlane.f32.xlu0 %v829
      %v831 = vpop.xlane.xlu0 %830
      %v832 = vsel %vm684, %v511, 0.0
      %v833 = vadd.f32 %v509, %v832
      %834 = vadd.xlane.f32.xlu0 %v833
      %v835 = vpop.xlane.xlu0 %834
      %v836 = vsel %vm684, %v517, 0.0
      %v837 = vadd.f32 %v515, %v836
      %838 = vadd.xlane.f32.xlu0 %v837
      %v839 = vpop.xlane.xlu0 %838
      %v840 = vsel %vm684, %v521, 0.0
      %v841 = vadd.f32 %v519, %v840
      %842 = vadd.xlane.f32.xlu0 %v841
      %v843 = vpop.xlane.xlu0 %842
      %v844 = vsel %vm684, %v527, 0.0
      %v845 = vadd.f32 %v525, %v844
      %846 = vadd.xlane.f32.xlu0 %v845
      %v847 = vpop.xlane.xlu0 %846
      %v848 = vsel %vm684, %v531, 0.0
      %v849 = vadd.f32 %v529, %v848
      %850 = vadd.xlane.f32.xlu0 %v849
      %v851 = vpop.xlane.xlu0 %850
      %v852 = vsel %vm684, %v537, 0.0
      %v853 = vadd.f32 %v535, %v852
      %854 = vadd.xlane.f32.xlu0 %v853
      %v855 = vpop.xlane.xlu0 %854
      %v856 = vsel %vm684, %v541, 0.0
      %v857 = vadd.f32 %v539, %v856
      %858 = vadd.xlane.f32.xlu0 %v857
      %v859 = vpop.xlane.xlu0 %858
      %v860 = vsel %vm684, %v547, 0.0
      %v861 = vadd.f32 %v545, %v860
      %862 = vadd.xlane.f32.xlu0 %v861
      %v863 = vpop.xlane.xlu0 %862
      %v864 = vsel %vm684, %v551, 0.0
      %v865 = vadd.f32 %v549, %v864
      %866 = vadd.xlane.f32.xlu0 %v865
      %v867 = vpop.xlane.xlu0 %866
      %v868 = vsel %vm684, %v557, 0.0
      %v869 = vadd.f32 %v555, %v868
      %870 = vadd.xlane.f32.xlu0 %v869
      %v871 = vpop.xlane.xlu0 %870
      %v872 = vsel %vm684, %v561, 0.0
      %v873 = vadd.f32 %v559, %v872
      %874 = vadd.xlane.f32.xlu0 %v873
      %v875 = vpop.xlane.xlu0 %874
      %v876 = vsel %vm684, %v567, 0.0
      %v877 = vadd.f32 %v565, %v876
      %878 = vadd.xlane.f32.xlu0 %v877
      %v879 = vpop.xlane.xlu0 %878
      %v880 = vsel %vm684, %v571, 0.0
      %v881 = vadd.f32 %v569, %v880
      %882 = vadd.xlane.f32.xlu0 %v881
      %v883 = vpop.xlane.xlu0 %882
      %v884 = vsel %vm684, %v577, 0.0
      %v885 = vadd.f32 %v575, %v884
      %886 = vadd.xlane.f32.xlu0 %v885
      %v887 = vpop.xlane.xlu0 %886
      %v888 = vsel %vm684, %v581, 0.0
      %v889 = vadd.f32 %v579, %v888
      %890 = vadd.xlane.f32.xlu0 %v889
      %v891 = vpop.xlane.xlu0 %890
      %v892 = vsel %vm684, %v587, 0.0
      %v893 = vadd.f32 %v585, %v892
      %894 = vadd.xlane.f32.xlu0 %v893
      %v895 = vpop.xlane.xlu0 %894
      %v896 = vsel %vm684, %v591, 0.0
      %v897 = vadd.f32 %v589, %v896
      %898 = vadd.xlane.f32.xlu0 %v897
      %v899 = vpop.xlane.xlu0 %898
      %v900 = vsel %vm684, %v597, 0.0
      %v901 = vadd.f32 %v595, %v900
      %902 = vadd.xlane.f32.xlu0 %v901
      %v903 = vpop.xlane.xlu0 %902
      %v904 = vsel %vm684, %v601, 0.0
      %v905 = vadd.f32 %v599, %v904
      %906 = vadd.xlane.f32.xlu0 %v905
      %v907 = vpop.xlane.xlu0 %906
      %v908 = vsel %vm684, %v607, 0.0
      %v909 = vadd.f32 %v605, %v908
      %910 = vadd.xlane.f32.xlu0 %v909
      %v911 = vpop.xlane.xlu0 %910
      %v912 = vsel %vm684, %v611, 0.0
      %v913 = vadd.f32 %v609, %v912
      %914 = vadd.xlane.f32.xlu0 %v913
      %v915 = vpop.xlane.xlu0 %914
      %v916 = vsel %vm684, %v617, 0.0
      %v917 = vadd.f32 %v615, %v916
      %918 = vadd.xlane.f32.xlu0 %v917
      %v919 = vpop.xlane.xlu0 %918
      %v920 = vsel %vm684, %v621, 0.0
      %v921 = vadd.f32 %v619, %v920
      %922 = vadd.xlane.f32.xlu0 %v921
      %v923 = vpop.xlane.xlu0 %922
      %v924 = vsel %vm684, %v627, 0.0
      %v925 = vadd.f32 %v625, %v924
      %926 = vadd.xlane.f32.xlu0 %v925
      %v927 = vpop.xlane.xlu0 %926
      %v928 = vsel %vm684, %v631, 0.0
      %v929 = vadd.f32 %v629, %v928
      %930 = vadd.xlane.f32.xlu0 %v929
      %v931 = vpop.xlane.xlu0 %930
      %v932 = vsel %vm684, %v637, 0.0
      %v933 = vadd.f32 %v635, %v932
      %934 = vadd.xlane.f32.xlu0 %v933
      %v935 = vpop.xlane.xlu0 %934
      %v936 = vsel %vm684, %v641, 0.0
      %v937 = vadd.f32 %v639, %v936
      %938 = vadd.xlane.f32.xlu0 %v937
      %v939 = vpop.xlane.xlu0 %938
      %v940 = vsel %vm684, %v647, 0.0
      %v941 = vadd.f32 %v645, %v940
      %942 = vadd.xlane.f32.xlu0 %v941
      %v943 = vpop.xlane.xlu0 %942
      %v944 = vsel %vm684, %v651, 0.0
      %v945 = vadd.f32 %v649, %v944
      %946 = vadd.xlane.f32.xlu0 %v945
      %v947 = vpop.xlane.xlu0 %946
      %v948 = vsel %vm684, %v657, 0.0
      %v949 = vadd.f32 %v655, %v948
      %950 = vadd.xlane.f32.xlu0 %v949
      %v951 = vpop.xlane.xlu0 %950
      %v952 = vsel %vm684, %v661, 0.0
      %v953 = vadd.f32 %v659, %v952
      %954 = vadd.xlane.f32.xlu0 %v953
      %v955 = vpop.xlane.xlu0 %954
      %v956 = vsel %vm684, %v667, 0.0
      %v957 = vadd.f32 %v665, %v956
      %958 = vadd.xlane.f32.xlu0 %v957
      %v959 = vpop.xlane.xlu0 %958
      %v960 = vsel %vm684, %v671, 0.0
      %v961 = vadd.f32 %v669, %v960
      %962 = vadd.xlane.f32.xlu0 %v961
      %v963 = vpop.xlane.xlu0 %962
      %v964 = vsel %vm684, %v677, 0.0
      %v965 = vadd.f32 %v675, %v964
      %966 = vadd.xlane.f32.xlu0 %v965
      %v967 = vpop.xlane.xlu0 %966
      %v968 = vsel %vm684, %v681, 0.0
      %v969 = vadd.f32 %v679, %v968
      %970 = vadd.xlane.f32.xlu0 %v969
      %v971 = vpop.xlane.xlu0 %970
      %v972 = vadd.f32 %v783, 0.0
      %v973 = vadd.f32 %v787, 0.0
      %v974 = vadd.f32 %v791, 0.0
      %v975 = vadd.f32 %v795, 0.0
      %v976 = vadd.f32 %v799, 0.0
      %v977 = vadd.f32 %v803, 0.0
      %v978 = vadd.f32 %v807, 0.0
      %v979 = vadd.f32 %v811, 0.0
      %v980 = vadd.f32 %v815, 0.0
      %v981 = vadd.f32 %v819, 0.0
      %v982 = vadd.f32 %v823, 0.0
      %v983 = vadd.f32 %v827, 0.0
      %v984 = vadd.f32 %v831, 0.0
      %v985 = vadd.f32 %v835, 0.0
      %v986 = vadd.f32 %v839, 0.0
      %v987 = vadd.f32 %v843, 0.0
      %v988 = vadd.f32 %v847, 0.0
      %v989 = vadd.f32 %v851, 0.0
      %v990 = vadd.f32 %v855, 0.0
      %v991 = vadd.f32 %v859, 0.0
      %v992 = vadd.f32 %v863, 0.0
      %v993 = vadd.f32 %v867, 0.0
      %v994 = vadd.f32 %v871, 0.0
      %v995 = vadd.f32 %v875, 0.0
      %v996 = vadd.f32 %v879, 0.0
      %v997 = vadd.f32 %v883, 0.0
      %v998 = vadd.f32 %v887, 0.0
      %v999 = vadd.f32 %v891, 0.0
      %v1000 = vadd.f32 %v895, 0.0
      %v1001 = vadd.f32 %v899, 0.0
      %v1002 = vadd.f32 %v903, 0.0
      %v1003 = vadd.f32 %v907, 0.0
      %v1004 = vadd.f32 %v911, 0.0
      %v1005 = vadd.f32 %v915, 0.0
      %v1006 = vadd.f32 %v919, 0.0
      %v1007 = vadd.f32 %v923, 0.0
      %v1008 = vadd.f32 %v927, 0.0
      %v1009 = vadd.f32 %v931, 0.0
      %v1010 = vadd.f32 %v935, 0.0
      %v1011 = vadd.f32 %v939, 0.0
      %v1012 = vadd.f32 %v943, 0.0
      %v1013 = vadd.f32 %v947, 0.0
      %v1014 = vadd.f32 %v951, 0.0
      %v1015 = vadd.f32 %v955, 0.0
      %v1016 = vadd.f32 %v959, 0.0
      %v1017 = vadd.f32 %v963, 0.0
      %v1018 = vadd.f32 %v967, 0.0
      %v1019 = vadd.f32 %v971, 0.0
      %v1020 = vmul.f32 %v972, 0.0051020407
      %v1021 = vmul.f32 %v973, 0.0051020407
      %v1022 = vmul.f32 %v974, 0.0051020407
      %v1023 = vmul.f32 %v975, 0.0051020407
      %v1024 = vmul.f32 %v976, 0.0051020407
      %v1025 = vmul.f32 %v977, 0.0051020407
      %v1026 = vmul.f32 %v978, 0.0051020407
      %v1027 = vmul.f32 %v979, 0.0051020407
      %v1028 = vmul.f32 %v980, 0.0051020407
      %v1029 = vmul.f32 %v981, 0.0051020407
      %v1030 = vmul.f32 %v982, 0.0051020407
      %v1031 = vmul.f32 %v983, 0.0051020407
      %v1032 = vmul.f32 %v984, 0.0051020407
      %v1033 = vmul.f32 %v985, 0.0051020407
      %v1034 = vmul.f32 %v986, 0.0051020407
      %v1035 = vmul.f32 %v987, 0.0051020407
      %v1036 = vmul.f32 %v988, 0.0051020407
      %v1037 = vmul.f32 %v989, 0.0051020407
      %v1038 = vmul.f32 %v990, 0.0051020407
      %v1039 = vmul.f32 %v991, 0.0051020407
      %v1040 = vmul.f32 %v992, 0.0051020407
      %v1041 = vmul.f32 %v993, 0.0051020407
      %v1042 = vmul.f32 %v994, 0.0051020407
      %v1043 = vmul.f32 %v995, 0.0051020407
      %v1044 = vmul.f32 %v996, 0.0051020407
      %v1045 = vmul.f32 %v997, 0.0051020407
      %v1046 = vmul.f32 %v998, 0.0051020407
      %v1047 = vmul.f32 %v999, 0.0051020407
      %v1048 = vmul.f32 %v1000, 0.0051020407
      %v1049 = vmul.f32 %v1001, 0.0051020407
      %v1050 = vmul.f32 %v1002, 0.0051020407
      %v1051 = vmul.f32 %v1003, 0.0051020407
      %v1052 = vmul.f32 %v1004, 0.0051020407
      %v1053 = vmul.f32 %v1005, 0.0051020407
      %v1054 = vmul.f32 %v1006, 0.0051020407
      %v1055 = vmul.f32 %v1007, 0.0051020407
      %v1056 = vmul.f32 %v1008, 0.0051020407
      %v1057 = vmul.f32 %v1009, 0.0051020407
      %v1058 = vmul.f32 %v1010, 0.0051020407
      %v1059 = vmul.f32 %v1011, 0.0051020407
      %v1060 = vmul.f32 %v1012, 0.0051020407
      %v1061 = vmul.f32 %v1013, 0.0051020407
      %v1062 = vmul.f32 %v1014, 0.0051020407
      %v1063 = vmul.f32 %v1015, 0.0051020407
      %v1064 = vmul.f32 %v1016, 0.0051020407
      %v1065 = vmul.f32 %v1017, 0.0051020407
      %v1066 = vmul.f32 %v1018, 0.0051020407
      %v1067 = vmul.f32 %v1019, 0.0051020407
      %v1068 = vld [vmem:[#allocation2] sm:$0xff]
      %v1069 = vld [vmem:[#allocation2 + $0x8] sm:$0xff]
      %v1070 = vld [vmem:[#allocation2 + $0x10] sm:$0xff]
      %v1071 = vld [vmem:[#allocation2 + $0x18] sm:$0xff]
      %v1072 = vld [vmem:[#allocation2 + $0x20] sm:$0xff]
      %v1073 = vld [vmem:[#allocation2 + $0x28] sm:$0xff]
      %v1074 = vld [vmem:[#allocation2 + $0x30] sm:$0xff]
      %v1075 = vld [vmem:[#allocation2 + $0x38] sm:$0xff]
      %v1076 = vld [vmem:[#allocation2 + $0x40] sm:$0xff]
      %v1077 = vld [vmem:[#allocation2 + $0x48] sm:$0xff]
      %v1078 = vld [vmem:[#allocation2 + $0x50] sm:$0xff]
      %v1079 = vld [vmem:[#allocation2 + $0x58] sm:$0xff]
      %v1080 = vld [vmem:[#allocation2 + $0x60] sm:$0xff]
      %v1081 = vld [vmem:[#allocation2 + $0x68] sm:$0xff]
      %v1082 = vld [vmem:[#allocation2 + $0x70] sm:$0xff]
      %v1083 = vld [vmem:[#allocation2 + $0x78] sm:$0xff]
      %v1084 = vld [vmem:[#allocation2 + $0x80] sm:$0xff]
      %v1085 = vld [vmem:[#allocation2 + $0x88] sm:$0xff]
      %v1086 = vld [vmem:[#allocation2 + $0x90] sm:$0xff]
      %v1087 = vld [vmem:[#allocation2 + $0x98] sm:$0xff]
      %v1088 = vld [vmem:[#allocation2 + $0xa0] sm:$0xff]
      %v1089 = vld [vmem:[#allocation2 + $0xa8] sm:$0xff]
      %v1090 = vld [vmem:[#allocation2 + $0xb0] sm:$0xff]
      %v1091 = vld [vmem:[#allocation2 + $0xb8] sm:$0xff]
      %v1092 = vld [vmem:[#allocation2 + $0xc0] sm:$0xff]
      %v1093 = vld [vmem:[#allocation2 + $0xc8] sm:$0xff]
      %v1094 = vld [vmem:[#allocation2 + $0xd0] sm:$0xff]
      %v1095 = vld [vmem:[#allocation2 + $0xd8] sm:$0xff]
      %v1096 = vld [vmem:[#allocation2 + $0xe0] sm:$0xff]
      %v1097 = vld [vmem:[#allocation2 + $0xe8] sm:$0xff]
      %v1098 = vld [vmem:[#allocation2 + $0xf0] sm:$0xff]
      %v1099 = vld [vmem:[#allocation2 + $0xf8] sm:$0xff]
      %v1100 = vld [vmem:[#allocation2 + $0x100] sm:$0xff]
      %v1101 = vld [vmem:[#allocation2 + $0x108] sm:$0xff]
      %v1102 = vld [vmem:[#allocation2 + $0x110] sm:$0xff]
      %v1103 = vld [vmem:[#allocation2 + $0x118] sm:$0xff]
      %v1104 = vld [vmem:[#allocation2 + $0x120] sm:$0xff]
      %v1105 = vld [vmem:[#allocation2 + $0x128] sm:$0xff]
      %v1106 = vld [vmem:[#allocation2 + $0x130] sm:$0xff]
      %v1107 = vld [vmem:[#allocation2 + $0x138] sm:$0xff]
      %v1108 = vld [vmem:[#allocation2 + $0x140] sm:$0xff]
      %v1109 = vld [vmem:[#allocation2 + $0x148] sm:$0xff]
      %v1110 = vld [vmem:[#allocation2 + $0x150] sm:$0xff]
      %v1111 = vld [vmem:[#allocation2 + $0x158] sm:$0xff]
      %v1112 = vld [vmem:[#allocation2 + $0x160] sm:$0xff]
      %v1113 = vld [vmem:[#allocation2 + $0x168] sm:$0xff]
      %v1114 = vld [vmem:[#allocation2 + $0x170] sm:$0xff]
      %v1115 = vld [vmem:[#allocation2 + $0x178] sm:$0xff]
      %v1116 = vld [vmem:[#allocation2 + $0x180] sm:$0xff]
      %v1117 = vld [vmem:[#allocation2 + $0x188] sm:$0xff]
      %v1118 = vld [vmem:[#allocation2 + $0x190] sm:$0xff]
      %v1119 = vld [vmem:[#allocation2 + $0x198] sm:$0xff]
      %v1120 = vld [vmem:[#allocation2 + $0x1a0] sm:$0xff]
      %v1121 = vld [vmem:[#allocation2 + $0x1a8] sm:$0xff]
      %v1122 = vld [vmem:[#allocation2 + $0x1b0] sm:$0xff]
      %v1123 = vld [vmem:[#allocation2 + $0x1b8] sm:$0xff]
      %v1124 = vld [vmem:[#allocation2 + $0x1c0] sm:$0xff]
      %v1125 = vld [vmem:[#allocation2 + $0x1c8] sm:$0xff]
      %v1126 = vld [vmem:[#allocation2 + $0x1d0] sm:$0xff]
      %v1127 = vld [vmem:[#allocation2 + $0x1d8] sm:$0xff]
      %v1128 = vld [vmem:[#allocation2 + $0x1e0] sm:$0xff]
      %v1129 = vld [vmem:[#allocation2 + $0x1e8] sm:$0xff]
      %v1130 = vld [vmem:[#allocation2 + $0x1f0] sm:$0xff]
      %v1131 = vld [vmem:[#allocation2 + $0x1f8] sm:$0xff]
      %v1132 = vld [vmem:[#allocation2 + $0x200] sm:$0xff]
      %v1133 = vld [vmem:[#allocation2 + $0x208] sm:$0xff]
      %v1134 = vld [vmem:[#allocation2 + $0x210] sm:$0xff]
      %v1135 = vld [vmem:[#allocation2 + $0x218] sm:$0xff]
      %v1136 = vld [vmem:[#allocation2 + $0x220] sm:$0xff]
      %v1137 = vld [vmem:[#allocation2 + $0x228] sm:$0xff]
      %v1138 = vld [vmem:[#allocation2 + $0x230] sm:$0xff]
      %v1139 = vld [vmem:[#allocation2 + $0x238] sm:$0xff]
      %v1140 = vld [vmem:[#allocation2 + $0x240] sm:$0xff]
      %v1141 = vld [vmem:[#allocation2 + $0x248] sm:$0xff]
      %v1142 = vld [vmem:[#allocation2 + $0x250] sm:$0xff]
      %v1143 = vld [vmem:[#allocation2 + $0x258] sm:$0xff]
      %v1144 = vld [vmem:[#allocation2 + $0x260] sm:$0xff]
      %v1145 = vld [vmem:[#allocation2 + $0x268] sm:$0xff]
      %v1146 = vld [vmem:[#allocation2 + $0x270] sm:$0xff]
      %v1147 = vld [vmem:[#allocation2 + $0x278] sm:$0xff]
      %v1148 = vld [vmem:[#allocation2 + $0x280] sm:$0xff]
      %v1149 = vld [vmem:[#allocation2 + $0x288] sm:$0xff]
      %v1150 = vld [vmem:[#allocation2 + $0x290] sm:$0xff]
      %v1151 = vld [vmem:[#allocation2 + $0x298] sm:$0xff]
      %v1152 = vld [vmem:[#allocation2 + $0x2a0] sm:$0xff]
      %v1153 = vld [vmem:[#allocation2 + $0x2a8] sm:$0xff]
      %v1154 = vld [vmem:[#allocation2 + $0x2b0] sm:$0xff]
      %v1155 = vld [vmem:[#allocation2 + $0x2b8] sm:$0xff]
      %v1156 = vld [vmem:[#allocation2 + $0x2c0] sm:$0xff]
      %v1157 = vld [vmem:[#allocation2 + $0x2c8] sm:$0xff]
      %v1158 = vld [vmem:[#allocation2 + $0x2d0] sm:$0xff]
      %v1159 = vld [vmem:[#allocation2 + $0x2d8] sm:$0xff]
      %v1160 = vld [vmem:[#allocation2 + $0x2e0] sm:$0xff]
      %v1161 = vld [vmem:[#allocation2 + $0x2e8] sm:$0xff]
      %v1162 = vld [vmem:[#allocation2 + $0x2f0] sm:$0xff]
      %v1163 = vld [vmem:[#allocation2 + $0x2f8] sm:$0xff]
      %v1164 = vsub.f32 %v1068, %v1020
      %v1165 = vsub.f32 %v1069, %v1020
      %v1166 = vsub.f32 %v1070, %v1021
      %v1167 = vsub.f32 %v1071, %v1021
      %v1168 = vsub.f32 %v1072, %v1022
      %v1169 = vsub.f32 %v1073, %v1022
      %v1170 = vsub.f32 %v1074, %v1023
      %v1171 = vsub.f32 %v1075, %v1023
      %v1172 = vsub.f32 %v1076, %v1024
      %v1173 = vsub.f32 %v1077, %v1024
      %v1174 = vsub.f32 %v1078, %v1025
      %v1175 = vsub.f32 %v1079, %v1025
      %v1176 = vsub.f32 %v1080, %v1026
      %v1177 = vsub.f32 %v1081, %v1026
      %v1178 = vsub.f32 %v1082, %v1027
      %v1179 = vsub.f32 %v1083, %v1027
      %v1180 = vsub.f32 %v1084, %v1028
      %v1181 = vsub.f32 %v1085, %v1028
      %v1182 = vsub.f32 %v1086, %v1029
      %v1183 = vsub.f32 %v1087, %v1029
      %v1184 = vsub.f32 %v1088, %v1030
      %v1185 = vsub.f32 %v1089, %v1030
      %v1186 = vsub.f32 %v1090, %v1031
      %v1187 = vsub.f32 %v1091, %v1031
      %v1188 = vsub.f32 %v1092, %v1032
      %v1189 = vsub.f32 %v1093, %v1032
      %v1190 = vsub.f32 %v1094, %v1033
      %v1191 = vsub.f32 %v1095, %v1033
      %v1192 = vsub.f32 %v1096, %v1034
      %v1193 = vsub.f32 %v1097, %v1034
      %v1194 = vsub.f32 %v1098, %v1035
      %v1195 = vsub.f32 %v1099, %v1035
      %v1196 = vsub.f32 %v1100, %v1036
      %v1197 = vsub.f32 %v1101, %v1036
      %v1198 = vsub.f32 %v1102, %v1037
      %v1199 = vsub.f32 %v1103, %v1037
      %v1200 = vsub.f32 %v1104, %v1038
      %v1201 = vsub.f32 %v1105, %v1038
      %v1202 = vsub.f32 %v1106, %v1039
      %v1203 = vsub.f32 %v1107, %v1039
      %v1204 = vsub.f32 %v1108, %v1040
      %v1205 = vsub.f32 %v1109, %v1040
      %v1206 = vsub.f32 %v1110, %v1041
      %v1207 = vsub.f32 %v1111, %v1041
      %v1208 = vsub.f32 %v1112, %v1042
      %v1209 = vsub.f32 %v1113, %v1042
      %v1210 = vsub.f32 %v1114, %v1043
      %v1211 = vsub.f32 %v1115, %v1043
      %v1212 = vsub.f32 %v1116, %v1044
      %v1213 = vsub.f32 %v1117, %v1044
      %v1214 = vsub.f32 %v1118, %v1045
      %v1215 = vsub.f32 %v1119, %v1045
      %v1216 = vsub.f32 %v1120, %v1046
      %v1217 = vsub.f32 %v1121, %v1046
      %v1218 = vsub.f32 %v1122, %v1047
      %v1219 = vsub.f32 %v1123, %v1047
      %v1220 = vsub.f32 %v1124, %v1048
      %v1221 = vsub.f32 %v1125, %v1048
      %v1222 = vsub.f32 %v1126, %v1049
      %v1223 = vsub.f32 %v1127, %v1049
      %v1224 = vsub.f32 %v1128, %v1050
      %v1225 = vsub.f32 %v1129, %v1050
      %v1226 = vsub.f32 %v1130, %v1051
      %v1227 = vsub.f32 %v1131, %v1051
      %v1228 = vsub.f32 %v1132, %v1052
      %v1229 = vsub.f32 %v1133, %v1052
      %v1230 = vsub.f32 %v1134, %v1053
      %v1231 = vsub.f32 %v1135, %v1053
      %v1232 = vsub.f32 %v1136, %v1054
      %v1233 = vsub.f32 %v1137, %v1054
      %v1234 = vsub.f32 %v1138, %v1055
      %v1235 = vsub.f32 %v1139, %v1055
      %v1236 = vsub.f32 %v1140, %v1056
      %v1237 = vsub.f32 %v1141, %v1056
      %v1238 = vsub.f32 %v1142, %v1057
      %v1239 = vsub.f32 %v1143, %v1057
      %v1240 = vsub.f32 %v1144, %v1058
      %v1241 = vsub.f32 %v1145, %v1058
      %v1242 = vsub.f32 %v1146, %v1059
      %v1243 = vsub.f32 %v1147, %v1059
      %v1244 = vsub.f32 %v1148, %v1060
      %v1245 = vsub.f32 %v1149, %v1060
      %v1246 = vsub.f32 %v1150, %v1061
      %v1247 = vsub.f32 %v1151, %v1061
      %v1248 = vsub.f32 %v1152, %v1062
      %v1249 = vsub.f32 %v1153, %v1062
      %v1250 = vsub.f32 %v1154, %v1063
      %v1251 = vsub.f32 %v1155, %v1063
      %v1252 = vsub.f32 %v1156, %v1064
      %v1253 = vsub.f32 %v1157, %v1064
      %v1254 = vsub.f32 %v1158, %v1065
      %v1255 = vsub.f32 %v1159, %v1065
      %v1256 = vsub.f32 %v1160, %v1066
      %v1257 = vsub.f32 %v1161, %v1066
      %v1258 = vsub.f32 %v1162, %v1067
      %v1259 = vsub.f32 %v1163, %v1067
      %v1260 = vmul.f32 %v1164, %v1164
      %v1261 = vmul.f32 %v1165, %v1165
      %v1262 = vmul.f32 %v1166, %v1166
      %v1263 = vmul.f32 %v1167, %v1167
      %v1264 = vmul.f32 %v1168, %v1168
      %v1265 = vmul.f32 %v1169, %v1169
      %v1266 = vmul.f32 %v1170, %v1170
      %v1267 = vmul.f32 %v1171, %v1171
      %v1268 = vmul.f32 %v1172, %v1172
      %v1269 = vmul.f32 %v1173, %v1173
      %v1270 = vmul.f32 %v1174, %v1174
      %v1271 = vmul.f32 %v1175, %v1175
      %v1272 = vmul.f32 %v1176, %v1176
      %v1273 = vmul.f32 %v1177, %v1177
      %v1274 = vmul.f32 %v1178, %v1178
      %v1275 = vmul.f32 %v1179, %v1179
      %v1276 = vmul.f32 %v1180, %v1180
      %v1277 = vmul.f32 %v1181, %v1181
      %v1278 = vmul.f32 %v1182, %v1182
      %v1279 = vmul.f32 %v1183, %v1183
      %v1280 = vmul.f32 %v1184, %v1184
      %v1281 = vmul.f32 %v1185, %v1185
      %v1282 = vmul.f32 %v1186, %v1186
      %v1283 = vmul.f32 %v1187, %v1187
      %v1284 = vmul.f32 %v1188, %v1188
      %v1285 = vmul.f32 %v1189, %v1189
      %v1286 = vmul.f32 %v1190, %v1190
      %v1287 = vmul.f32 %v1191, %v1191
      %v1288 = vmul.f32 %v1192, %v1192
      %v1289 = vmul.f32 %v1193, %v1193
      %v1290 = vmul.f32 %v1194, %v1194
      %v1291 = vmul.f32 %v1195, %v1195
      %v1292 = vmul.f32 %v1196, %v1196
      %v1293 = vmul.f32 %v1197, %v1197
      %v1294 = vmul.f32 %v1198, %v1198
      %v1295 = vmul.f32 %v1199, %v1199
      %v1296 = vmul.f32 %v1200, %v1200
      %v1297 = vmul.f32 %v1201, %v1201
      %v1298 = vmul.f32 %v1202, %v1202
      %v1299 = vmul.f32 %v1203, %v1203
      %v1300 = vmul.f32 %v1204, %v1204
      %v1301 = vmul.f32 %v1205, %v1205
      %v1302 = vmul.f32 %v1206, %v1206
      %v1303 = vmul.f32 %v1207, %v1207
      %v1304 = vmul.f32 %v1208, %v1208
      %v1305 = vmul.f32 %v1209, %v1209
      %v1306 = vmul.f32 %v1210, %v1210
      %v1307 = vmul.f32 %v1211, %v1211
      %v1308 = vmul.f32 %v1212, %v1212
      %v1309 = vmul.f32 %v1213, %v1213
      %v1310 = vmul.f32 %v1214, %v1214
      %v1311 = vmul.f32 %v1215, %v1215
      %v1312 = vmul.f32 %v1216, %v1216
      %v1313 = vmul.f32 %v1217, %v1217
      %v1314 = vmul.f32 %v1218, %v1218
      %v1315 = vmul.f32 %v1219, %v1219
      %v1316 = vmul.f32 %v1220, %v1220
      %v1317 = vmul.f32 %v1221, %v1221
      %v1318 = vmul.f32 %v1222, %v1222
      %v1319 = vmul.f32 %v1223, %v1223
      %v1320 = vmul.f32 %v1224, %v1224
      %v1321 = vmul.f32 %v1225, %v1225
      %v1322 = vmul.f32 %v1226, %v1226
      %v1323 = vmul.f32 %v1227, %v1227
      %v1324 = vmul.f32 %v1228, %v1228
      %v1325 = vmul.f32 %v1229, %v1229
      %v1326 = vmul.f32 %v1230, %v1230
      %v1327 = vmul.f32 %v1231, %v1231
      %v1328 = vmul.f32 %v1232, %v1232
      %v1329 = vmul.f32 %v1233, %v1233
      %v1330 = vmul.f32 %v1234, %v1234
      %v1331 = vmul.f32 %v1235, %v1235
      %v1332 = vmul.f32 %v1236, %v1236
      %v1333 = vmul.f32 %v1237, %v1237
      %v1334 = vmul.f32 %v1238, %v1238
      %v1335 = vmul.f32 %v1239, %v1239
      %v1336 = vmul.f32 %v1240, %v1240
      %v1337 = vmul.f32 %v1241, %v1241
      %v1338 = vmul.f32 %v1242, %v1242
      %v1339 = vmul.f32 %v1243, %v1243
      %v1340 = vmul.f32 %v1244, %v1244
      %v1341 = vmul.f32 %v1245, %v1245
      %v1342 = vmul.f32 %v1246, %v1246
      %v1343 = vmul.f32 %v1247, %v1247
      %v1344 = vmul.f32 %v1248, %v1248
      %v1345 = vmul.f32 %v1249, %v1249
      %v1346 = vmul.f32 %v1250, %v1250
      %v1347 = vmul.f32 %v1251, %v1251
      %v1348 = vmul.f32 %v1252, %v1252
      %v1349 = vmul.f32 %v1253, %v1253
      %v1350 = vmul.f32 %v1254, %v1254
      %v1351 = vmul.f32 %v1255, %v1255
      %v1352 = vmul.f32 %v1256, %v1256
      %v1353 = vmul.f32 %v1257, %v1257
      %v1354 = vmul.f32 %v1258, %v1258
      %v1355 = vmul.f32 %v1259, %v1259
      %v1356 = vsel %vm684, %v1261, 0.0
      %v1357 = vadd.f32 %v1260, %v1356
      %1358 = vadd.xlane.f32.xlu0 %v1357
      %v1359 = vpop.xlane.xlu0 %1358
      %v1360 = vsel %vm684, %v1263, 0.0
      %v1361 = vadd.f32 %v1262, %v1360
      %1362 = vadd.xlane.f32.xlu0 %v1361
      %v1363 = vpop.xlane.xlu0 %1362
      %v1364 = vsel %vm684, %v1265, 0.0
      %v1365 = vadd.f32 %v1264, %v1364
      %1366 = vadd.xlane.f32.xlu0 %v1365
      %v1367 = vpop.xlane.xlu0 %1366
      %v1368 = vsel %vm684, %v1267, 0.0
      %v1369 = vadd.f32 %v1266, %v1368
      %1370 = vadd.xlane.f32.xlu0 %v1369
      %v1371 = vpop.xlane.xlu0 %1370
      %v1372 = vsel %vm684, %v1269, 0.0
      %v1373 = vadd.f32 %v1268, %v1372
      %1374 = vadd.xlane.f32.xlu0 %v1373
      %v1375 = vpop.xlane.xlu0 %1374
      %v1376 = vsel %vm684, %v1271, 0.0
      %v1377 = vadd.f32 %v1270, %v1376
      %1378 = vadd.xlane.f32.xlu0 %v1377
      %v1379 = vpop.xlane.xlu0 %1378
      %v1380 = vsel %vm684, %v1273, 0.0
      %v1381 = vadd.f32 %v1272, %v1380
      %1382 = vadd.xlane.f32.xlu0 %v1381
      %v1383 = vpop.xlane.xlu0 %1382
      %v1384 = vsel %vm684, %v1275, 0.0
      %v1385 = vadd.f32 %v1274, %v1384
      %1386 = vadd.xlane.f32.xlu0 %v1385
      %v1387 = vpop.xlane.xlu0 %1386
      %v1388 = vsel %vm684, %v1277, 0.0
      %v1389 = vadd.f32 %v1276, %v1388
      %1390 = vadd.xlane.f32.xlu0 %v1389
      %v1391 = vpop.xlane.xlu0 %1390
      %v1392 = vsel %vm684, %v1279, 0.0
      %v1393 = vadd.f32 %v1278, %v1392
      %1394 = vadd.xlane.f32.xlu0 %v1393
      %v1395 = vpop.xlane.xlu0 %1394
      %v1396 = vsel %vm684, %v1281, 0.0
      %v1397 = vadd.f32 %v1280, %v1396
      %1398 = vadd.xlane.f32.xlu0 %v1397
      %v1399 = vpop.xlane.xlu0 %1398
      %v1400 = vsel %vm684, %v1283, 0.0
      %v1401 = vadd.f32 %v1282, %v1400
      %1402 = vadd.xlane.f32.xlu0 %v1401
      %v1403 = vpop.xlane.xlu0 %1402
      %v1404 = vsel %vm684, %v1285, 0.0
      %v1405 = vadd.f32 %v1284, %v1404
      %1406 = vadd.xlane.f32.xlu0 %v1405
      %v1407 = vpop.xlane.xlu0 %1406
      %v1408 = vsel %vm684, %v1287, 0.0
      %v1409 = vadd.f32 %v1286, %v1408
      %1410 = vadd.xlane.f32.xlu0 %v1409
      %v1411 = vpop.xlane.xlu0 %1410
      %v1412 = vsel %vm684, %v1289, 0.0
      %v1413 = vadd.f32 %v1288, %v1412
      %1414 = vadd.xlane.f32.xlu0 %v1413
      %v1415 = vpop.xlane.xlu0 %1414
      %v1416 = vsel %vm684, %v1291, 0.0
      %v1417 = vadd.f32 %v1290, %v1416
      %1418 = vadd.xlane.f32.xlu0 %v1417
      %v1419 = vpop.xlane.xlu0 %1418
      %v1420 = vsel %vm684, %v1293, 0.0
      %v1421 = vadd.f32 %v1292, %v1420
      %1422 = vadd.xlane.f32.xlu0 %v1421
      %v1423 = vpop.xlane.xlu0 %1422
      %v1424 = vsel %vm684, %v1295, 0.0
      %v1425 = vadd.f32 %v1294, %v1424
      %1426 = vadd.xlane.f32.xlu0 %v1425
      %v1427 = vpop.xlane.xlu0 %1426
      %v1428 = vsel %vm684, %v1297, 0.0
      %v1429 = vadd.f32 %v1296, %v1428
      %1430 = vadd.xlane.f32.xlu0 %v1429
      %v1431 = vpop.xlane.xlu0 %1430
      %v1432 = vsel %vm684, %v1299, 0.0
      %v1433 = vadd.f32 %v1298, %v1432
      %1434 = vadd.xlane.f32.xlu0 %v1433
      %v1435 = vpop.xlane.xlu0 %1434
      %v1436 = vsel %vm684, %v1301, 0.0
      %v1437 = vadd.f32 %v1300, %v1436
      %1438 = vadd.xlane.f32.xlu0 %v1437
      %v1439 = vpop.xlane.xlu0 %1438
      %v1440 = vsel %vm684, %v1303, 0.0
      %v1441 = vadd.f32 %v1302, %v1440
      %1442 = vadd.xlane.f32.xlu0 %v1441
      %v1443 = vpop.xlane.xlu0 %1442
      %v1444 = vsel %vm684, %v1305, 0.0
      %v1445 = vadd.f32 %v1304, %v1444
      %1446 = vadd.xlane.f32.xlu0 %v1445
      %v1447 = vpop.xlane.xlu0 %1446
      %v1448 = vsel %vm684, %v1307, 0.0
      %v1449 = vadd.f32 %v1306, %v1448
      %1450 = vadd.xlane.f32.xlu0 %v1449
      %v1451 = vpop.xlane.xlu0 %1450
      %v1452 = vsel %vm684, %v1309, 0.0
      %v1453 = vadd.f32 %v1308, %v1452
      %1454 = vadd.xlane.f32.xlu0 %v1453
      %v1455 = vpop.xlane.xlu0 %1454
      %v1456 = vsel %vm684, %v1311, 0.0
      %v1457 = vadd.f32 %v1310, %v1456
      %1458 = vadd.xlane.f32.xlu0 %v1457
      %v1459 = vpop.xlane.xlu0 %1458
      %v1460 = vsel %vm684, %v1313, 0.0
      %v1461 = vadd.f32 %v1312, %v1460
      %1462 = vadd.xlane.f32.xlu0 %v1461
      %v1463 = vpop.xlane.xlu0 %1462
      %v1464 = vsel %vm684, %v1315, 0.0
      %v1465 = vadd.f32 %v1314, %v1464
      %1466 = vadd.xlane.f32.xlu0 %v1465
      %v1467 = vpop.xlane.xlu0 %1466
      %v1468 = vsel %vm684, %v1317, 0.0
      %v1469 = vadd.f32 %v1316, %v1468
      %1470 = vadd.xlane.f32.xlu0 %v1469
      %v1471 = vpop.xlane.xlu0 %1470
      %v1472 = vsel %vm684, %v1319, 0.0
      %v1473 = vadd.f32 %v1318, %v1472
      %1474 = vadd.xlane.f32.xlu0 %v1473
      %v1475 = vpop.xlane.xlu0 %1474
      %v1476 = vsel %vm684, %v1321, 0.0
      %v1477 = vadd.f32 %v1320, %v1476
      %1478 = vadd.xlane.f32.xlu0 %v1477
      %v1479 = vpop.xlane.xlu0 %1478
      %v1480 = vsel %vm684, %v1323, 0.0
      %v1481 = vadd.f32 %v1322, %v1480
      %1482 = vadd.xlane.f32.xlu0 %v1481
      %v1483 = vpop.xlane.xlu0 %1482
      %v1484 = vsel %vm684, %v1325, 0.0
      %v1485 = vadd.f32 %v1324, %v1484
      %1486 = vadd.xlane.f32.xlu0 %v1485
      %v1487 = vpop.xlane.xlu0 %1486
      %v1488 = vsel %vm684, %v1327, 0.0
      %v1489 = vadd.f32 %v1326, %v1488
      %1490 = vadd.xlane.f32.xlu0 %v1489
      %v1491 = vpop.xlane.xlu0 %1490
      %v1492 = vsel %vm684, %v1329, 0.0
      %v1493 = vadd.f32 %v1328, %v1492
      %1494 = vadd.xlane.f32.xlu0 %v1493
      %v1495 = vpop.xlane.xlu0 %1494
      %v1496 = vsel %vm684, %v1331, 0.0
      %v1497 = vadd.f32 %v1330, %v1496
      %1498 = vadd.xlane.f32.xlu0 %v1497
      %v1499 = vpop.xlane.xlu0 %1498
      %v1500 = vsel %vm684, %v1333, 0.0
      %v1501 = vadd.f32 %v1332, %v1500
      %1502 = vadd.xlane.f32.xlu0 %v1501
      %v1503 = vpop.xlane.xlu0 %1502
      %v1504 = vsel %vm684, %v1335, 0.0
      %v1505 = vadd.f32 %v1334, %v1504
      %1506 = vadd.xlane.f32.xlu0 %v1505
      %v1507 = vpop.xlane.xlu0 %1506
      %v1508 = vsel %vm684, %v1337, 0.0
      %v1509 = vadd.f32 %v1336, %v1508
      %1510 = vadd.xlane.f32.xlu0 %v1509
      %v1511 = vpop.xlane.xlu0 %1510
      %v1512 = vsel %vm684, %v1339, 0.0
      %v1513 = vadd.f32 %v1338, %v1512
      %1514 = vadd.xlane.f32.xlu0 %v1513
      %v1515 = vpop.xlane.xlu0 %1514
      %v1516 = vsel %vm684, %v1341, 0.0
      %v1517 = vadd.f32 %v1340, %v1516
      %1518 = vadd.xlane.f32.xlu0 %v1517
      %v1519 = vpop.xlane.xlu0 %1518
      %v1520 = vsel %vm684, %v1343, 0.0
      %v1521 = vadd.f32 %v1342, %v1520
      %1522 = vadd.xlane.f32.xlu0 %v1521
      %v1523 = vpop.xlane.xlu0 %1522
      %v1524 = vsel %vm684, %v1345, 0.0
      %v1525 = vadd.f32 %v1344, %v1524
      %1526 = vadd.xlane.f32.xlu0 %v1525
      %v1527 = vpop.xlane.xlu0 %1526
      %v1528 = vsel %vm684, %v1347, 0.0
      %v1529 = vadd.f32 %v1346, %v1528
      %1530 = vadd.xlane.f32.xlu0 %v1529
      %v1531 = vpop.xlane.xlu0 %1530
      %v1532 = vsel %vm684, %v1349, 0.0
      %v1533 = vadd.f32 %v1348, %v1532
      %1534 = vadd.xlane.f32.xlu0 %v1533
      %v1535 = vpop.xlane.xlu0 %1534
      %v1536 = vsel %vm684, %v1351, 0.0
      %v1537 = vadd.f32 %v1350, %v1536
      %1538 = vadd.xlane.f32.xlu0 %v1537
      %v1539 = vpop.xlane.xlu0 %1538
      %v1540 = vsel %vm684, %v1353, 0.0
      %v1541 = vadd.f32 %v1352, %v1540
      %1542 = vadd.xlane.f32.xlu0 %v1541
      %v1543 = vpop.xlane.xlu0 %1542
      %v1544 = vsel %vm684, %v1355, 0.0
      %v1545 = vadd.f32 %v1354, %v1544
      %1546 = vadd.xlane.f32.xlu0 %v1545
      %v1547 = vpop.xlane.xlu0 %1546
      %v1548 = vadd.f32 %v1359, 0.0
      %v1549 = vadd.f32 %v1363, 0.0
      %v1550 = vadd.f32 %v1367, 0.0
      %v1551 = vadd.f32 %v1371, 0.0
      %v1552 = vadd.f32 %v1375, 0.0
      %v1553 = vadd.f32 %v1379, 0.0
      %v1554 = vadd.f32 %v1383, 0.0
      %v1555 = vadd.f32 %v1387, 0.0
      %v1556 = vadd.f32 %v1391, 0.0
      %v1557 = vadd.f32 %v1395, 0.0
      %v1558 = vadd.f32 %v1399, 0.0
      %v1559 = vadd.f32 %v1403, 0.0
      %v1560 = vadd.f32 %v1407, 0.0
      %v1561 = vadd.f32 %v1411, 0.0
      %v1562 = vadd.f32 %v1415, 0.0
      %v1563 = vadd.f32 %v1419, 0.0
      %v1564 = vadd.f32 %v1423, 0.0
      %v1565 = vadd.f32 %v1427, 0.0
      %v1566 = vadd.f32 %v1431, 0.0
      %v1567 = vadd.f32 %v1435, 0.0
      %v1568 = vadd.f32 %v1439, 0.0
      %v1569 = vadd.f32 %v1443, 0.0
      %v1570 = vadd.f32 %v1447, 0.0
      %v1571 = vadd.f32 %v1451, 0.0
      %v1572 = vadd.f32 %v1455, 0.0
      %v1573 = vadd.f32 %v1459, 0.0
      %v1574 = vadd.f32 %v1463, 0.0
      %v1575 = vadd.f32 %v1467, 0.0
      %v1576 = vadd.f32 %v1471, 0.0
      %v1577 = vadd.f32 %v1475, 0.0
      %v1578 = vadd.f32 %v1479, 0.0
      %v1579 = vadd.f32 %v1483, 0.0
      %v1580 = vadd.f32 %v1487, 0.0
      %v1581 = vadd.f32 %v1491, 0.0
      %v1582 = vadd.f32 %v1495, 0.0
      %v1583 = vadd.f32 %v1499, 0.0
      %v1584 = vadd.f32 %v1503, 0.0
      %v1585 = vadd.f32 %v1507, 0.0
      %v1586 = vadd.f32 %v1511, 0.0
      %v1587 = vadd.f32 %v1515, 0.0
      %v1588 = vadd.f32 %v1519, 0.0
      %v1589 = vadd.f32 %v1523, 0.0
      %v1590 = vadd.f32 %v1527, 0.0
      %v1591 = vadd.f32 %v1531, 0.0
      %v1592 = vadd.f32 %v1535, 0.0
      %v1593 = vadd.f32 %v1539, 0.0
      %v1594 = vadd.f32 %v1543, 0.0
      %v1595 = vadd.f32 %v1547, 0.0
      %v1596 = vmul.f32 %v1548, 0.0051020407
      %v1597 = vmul.f32 %v1549, 0.0051020407
      %v1598 = vmul.f32 %v1550, 0.0051020407
      %v1599 = vmul.f32 %v1551, 0.0051020407
      %v1600 = vmul.f32 %v1552, 0.0051020407
      %v1601 = vmul.f32 %v1553, 0.0051020407
      %v1602 = vmul.f32 %v1554, 0.0051020407
      %v1603 = vmul.f32 %v1555, 0.0051020407
      %v1604 = vmul.f32 %v1556, 0.0051020407
      %v1605 = vmul.f32 %v1557, 0.0051020407
      %v1606 = vmul.f32 %v1558, 0.0051020407
      %v1607 = vmul.f32 %v1559, 0.0051020407
      %v1608 = vmul.f32 %v1560, 0.0051020407
      %v1609 = vmul.f32 %v1561, 0.0051020407
      %v1610 = vmul.f32 %v1562, 0.0051020407
      %v1611 = vmul.f32 %v1563, 0.0051020407
      %v1612 = vmul.f32 %v1564, 0.0051020407
      %v1613 = vmul.f32 %v1565, 0.0051020407
      %v1614 = vmul.f32 %v1566, 0.0051020407
      %v1615 = vmul.f32 %v1567, 0.0051020407
      %v1616 = vmul.f32 %v1568, 0.0051020407
      %v1617 = vmul.f32 %v1569, 0.0051020407
      %v1618 = vmul.f32 %v1570, 0.0051020407
      %v1619 = vmul.f32 %v1571, 0.0051020407
      %v1620 = vmul.f32 %v1572, 0.0051020407
      %v1621 = vmul.f32 %v1573, 0.0051020407
      %v1622 = vmul.f32 %v1574, 0.0051020407
      %v1623 = vmul.f32 %v1575, 0.0051020407
      %v1624 = vmul.f32 %v1576, 0.0051020407
      %v1625 = vmul.f32 %v1577, 0.0051020407
      %v1626 = vmul.f32 %v1578, 0.0051020407
      %v1627 = vmul.f32 %v1579, 0.0051020407
      %v1628 = vmul.f32 %v1580, 0.0051020407
      %v1629 = vmul.f32 %v1581, 0.0051020407
      %v1630 = vmul.f32 %v1582, 0.0051020407
      %v1631 = vmul.f32 %v1583, 0.0051020407
      %v1632 = vmul.f32 %v1584, 0.0051020407
      %v1633 = vmul.f32 %v1585, 0.0051020407
      %v1634 = vmul.f32 %v1586, 0.0051020407
      %v1635 = vmul.f32 %v1587, 0.0051020407
      %v1636 = vmul.f32 %v1588, 0.0051020407
      %v1637 = vmul.f32 %v1589, 0.0051020407
      %v1638 = vmul.f32 %v1590, 0.0051020407
      %v1639 = vmul.f32 %v1591, 0.0051020407
      %v1640 = vmul.f32 %v1592, 0.0051020407
      %v1641 = vmul.f32 %v1593, 0.0051020407
      %v1642 = vmul.f32 %v1594, 0.0051020407
      %v1643 = vmul.f32 %v1595, 0.0051020407
      %v1644 = vld [vmem:[%s216] sm:$0xff]
      %v1645 = vld [vmem:[%s216 + $0x8] sm:$0xff]
      %v1646 = vld [vmem:[%s216 + $0x10] sm:$0xff]
      %v1647 = vld [vmem:[%s216 + $0x18] sm:$0xff]
      %v1648 = vld [vmem:[%s216 + $0x20] sm:$0xff]
      %v1649 = vld [vmem:[%s216 + $0x28] sm:$0xff]
      %v1650 = vld [vmem:[%s216 + $0x30] sm:$0xff]
      %v1651 = vld [vmem:[%s216 + $0x38] sm:$0xff]
      %v1652 = vld [vmem:[%s216 + $0x40] sm:$0xff]
      %v1653 = vld [vmem:[%s216 + $0x48] sm:$0xff]
      %v1654 = vld [vmem:[%s216 + $0x50] sm:$0xff]
      %v1655 = vld [vmem:[%s216 + $0x58] sm:$0xff]
      %v1656 = vld [vmem:[%s216 + $0x60] sm:$0xff]
      %v1657 = vld [vmem:[%s216 + $0x68] sm:$0xff]
      %v1658 = vld [vmem:[%s216 + $0x70] sm:$0xff]
      %v1659 = vld [vmem:[%s216 + $0x78] sm:$0xff]
      %v1660 = vld [vmem:[%s216 + $0x80] sm:$0xff]
      %v1661 = vld [vmem:[%s216 + $0x88] sm:$0xff]
      %v1662 = vld [vmem:[%s216 + $0x90] sm:$0xff]
      %v1663 = vld [vmem:[%s216 + $0x98] sm:$0xff]
      %v1664 = vld [vmem:[%s216 + $0xa0] sm:$0xff]
      %v1665 = vld [vmem:[%s216 + $0xa8] sm:$0xff]
      %v1666 = vld [vmem:[%s216 + $0xb0] sm:$0xff]
      %v1667 = vld [vmem:[%s216 + $0xb8] sm:$0xff]
      %v1668 = vld [vmem:[%s216 + $0xc0] sm:$0xff]
      %v1669 = vld [vmem:[%s216 + $0xc8] sm:$0xff]
      %v1670 = vld [vmem:[%s216 + $0xd0] sm:$0xff]
      %v1671 = vld [vmem:[%s216 + $0xd8] sm:$0xff]
      %v1672 = vld [vmem:[%s216 + $0xe0] sm:$0xff]
      %v1673 = vld [vmem:[%s216 + $0xe8] sm:$0xff]
      %v1674 = vld [vmem:[%s216 + $0xf0] sm:$0xff]
      %v1675 = vld [vmem:[%s216 + $0xf8] sm:$0xff]
      %v1676 = vld [vmem:[%s216 + $0x100] sm:$0xff]
      %v1677 = vld [vmem:[%s216 + $0x108] sm:$0xff]
      %v1678 = vld [vmem:[%s216 + $0x110] sm:$0xff]
      %v1679 = vld [vmem:[%s216 + $0x118] sm:$0xff]
      %v1680 = vld [vmem:[%s216 + $0x120] sm:$0xff]
      %v1681 = vld [vmem:[%s216 + $0x128] sm:$0xff]
      %v1682 = vld [vmem:[%s216 + $0x130] sm:$0xff]
      %v1683 = vld [vmem:[%s216 + $0x138] sm:$0xff]
      %v1684 = vld [vmem:[%s216 + $0x140] sm:$0xff]
      %v1685 = vld [vmem:[%s216 + $0x148] sm:$0xff]
      %v1686 = vld [vmem:[%s216 + $0x150] sm:$0xff]
      %v1687 = vld [vmem:[%s216 + $0x158] sm:$0xff]
      %v1688 = vld [vmem:[%s216 + $0x160] sm:$0xff]
      %v1689 = vld [vmem:[%s216 + $0x168] sm:$0xff]
      %v1690 = vld [vmem:[%s216 + $0x170] sm:$0xff]
      %v1691 = vld [vmem:[%s216 + $0x178] sm:$0xff]
      %v1692 = vadd.f32 %v1596, 0.001
      %v1693 = vadd.f32 %v1597, 0.001
      %v1694 = vadd.f32 %v1598, 0.001
      %v1695 = vadd.f32 %v1599, 0.001
      %v1696 = vadd.f32 %v1600, 0.001
      %v1697 = vadd.f32 %v1601, 0.001
      %v1698 = vadd.f32 %v1602, 0.001
      %v1699 = vadd.f32 %v1603, 0.001
      %v1700 = vadd.f32 %v1604, 0.001
      %v1701 = vadd.f32 %v1605, 0.001
      %v1702 = vadd.f32 %v1606, 0.001
      %v1703 = vadd.f32 %v1607, 0.001
      %v1704 = vadd.f32 %v1608, 0.001
      %v1705 = vadd.f32 %v1609, 0.001
      %v1706 = vadd.f32 %v1610, 0.001
      %v1707 = vadd.f32 %v1611, 0.001
      %v1708 = vadd.f32 %v1612, 0.001
      %v1709 = vadd.f32 %v1613, 0.001
      %v1710 = vadd.f32 %v1614, 0.001
      %v1711 = vadd.f32 %v1615, 0.001
      %v1712 = vadd.f32 %v1616, 0.001
      %v1713 = vadd.f32 %v1617, 0.001
      %v1714 = vadd.f32 %v1618, 0.001
      %v1715 = vadd.f32 %v1619, 0.001
      %v1716 = vadd.f32 %v1620, 0.001
      %v1717 = vadd.f32 %v1621, 0.001
      %v1718 = vadd.f32 %v1622, 0.001
      %v1719 = vadd.f32 %v1623, 0.001
      %v1720 = vadd.f32 %v1624, 0.001
      %v1721 = vadd.f32 %v1625, 0.001
      %v1722 = vadd.f32 %v1626, 0.001
      %v1723 = vadd.f32 %v1627, 0.001
      %v1724 = vadd.f32 %v1628, 0.001
      %v1725 = vadd.f32 %v1629, 0.001
      %v1726 = vadd.f32 %v1630, 0.001
      %v1727 = vadd.f32 %v1631, 0.001
      %v1728 = vadd.f32 %v1632, 0.001
      %v1729 = vadd.f32 %v1633, 0.001
      %v1730 = vadd.f32 %v1634, 0.001
      %v1731 = vadd.f32 %v1635, 0.001
      %v1732 = vadd.f32 %v1636, 0.001
      %v1733 = vadd.f32 %v1637, 0.001
      %v1734 = vadd.f32 %v1638, 0.001
      %v1735 = vadd.f32 %v1639, 0.001
      %v1736 = vadd.f32 %v1640, 0.001
      %v1737 = vadd.f32 %v1641, 0.001
      %v1738 = vadd.f32 %v1642, 0.001
      %v1739 = vadd.f32 %v1643, 0.001
      %v1740 = vrsqrt.pop %v1692
      %v1741 = vrsqrt.pop %v1693
      %v1742 = vrsqrt.pop %v1694
      %v1743 = vrsqrt.pop %v1695
      %v1744 = vrsqrt.pop %v1696
      %v1745 = vrsqrt.pop %v1697
      %v1746 = vrsqrt.pop %v1698
      %v1747 = vrsqrt.pop %v1699
      %v1748 = vrsqrt.pop %v1700
      %v1749 = vrsqrt.pop %v1701
      %v1750 = vrsqrt.pop %v1702
      %v1751 = vrsqrt.pop %v1703
      %v1752 = vrsqrt.pop %v1704
      %v1753 = vrsqrt.pop %v1705
      %v1754 = vrsqrt.pop %v1706
      %v1755 = vrsqrt.pop %v1707
      %v1756 = vrsqrt.pop %v1708
      %v1757 = vrsqrt.pop %v1709
      %v1758 = vrsqrt.pop %v1710
      %v1759 = vrsqrt.pop %v1711
      %v1760 = vrsqrt.pop %v1712
      %v1761 = vrsqrt.pop %v1713
      %v1762 = vrsqrt.pop %v1714
      %v1763 = vrsqrt.pop %v1715
      %v1764 = vrsqrt.pop %v1716
      %v1765 = vrsqrt.pop %v1717
      %v1766 = vrsqrt.pop %v1718
      %v1767 = vrsqrt.pop %v1719
      %v1768 = vrsqrt.pop %v1720
      %v1769 = vrsqrt.pop %v1721
      %v1770 = vrsqrt.pop %v1722
      %v1771 = vrsqrt.pop %v1723
      %v1772 = vrsqrt.pop %v1724
      %v1773 = vrsqrt.pop %v1725
      %v1774 = vrsqrt.pop %v1726
      %v1775 = vrsqrt.pop %v1727
      %v1776 = vrsqrt.pop %v1728
      %v1777 = vrsqrt.pop %v1729
      %v1778 = vrsqrt.pop %v1730
      %v1779 = vrsqrt.pop %v1731
      %v1780 = vrsqrt.pop %v1732
      %v1781 = vrsqrt.pop %v1733
      %v1782 = vrsqrt.pop %v1734
      %v1783 = vrsqrt.pop %v1735
      %v1784 = vrsqrt.pop %v1736
      %v1785 = vrsqrt.pop %v1737
      %v1786 = vrsqrt.pop %v1738
      %v1787 = vrsqrt.pop %v1739
      %v1788 = vmul.f32 %v1644, %v1740
      %v1789 = vmul.f32 %v1645, %v1741
      %v1790 = vmul.f32 %v1646, %v1742
      %v1791 = vmul.f32 %v1647, %v1743
      %v1792 = vmul.f32 %v1648, %v1744
      %v1793 = vmul.f32 %v1649, %v1745
      %v1794 = vmul.f32 %v1650, %v1746
      %v1795 = vmul.f32 %v1651, %v1747
      %v1796 = vmul.f32 %v1652, %v1748
      %v1797 = vmul.f32 %v1653, %v1749
      %v1798 = vmul.f32 %v1654, %v1750
      %v1799 = vmul.f32 %v1655, %v1751
      %v1800 = vmul.f32 %v1656, %v1752
      %v1801 = vmul.f32 %v1657, %v1753
      %v1802 = vmul.f32 %v1658, %v1754
      %v1803 = vmul.f32 %v1659, %v1755
      %v1804 = vmul.f32 %v1660, %v1756
      %v1805 = vmul.f32 %v1661, %v1757
      %v1806 = vmul.f32 %v1662, %v1758
      %v1807 = vmul.f32 %v1663, %v1759
      %v1808 = vmul.f32 %v1664, %v1760
      %v1809 = vmul.f32 %v1665, %v1761
      %v1810 = vmul.f32 %v1666, %v1762
      %v1811 = vmul.f32 %v1667, %v1763
      %v1812 = vmul.f32 %v1668, %v1764
      %v1813 = vmul.f32 %v1669, %v1765
      %v1814 = vmul.f32 %v1670, %v1766
      %v1815 = vmul.f32 %v1671, %v1767
      %v1816 = vmul.f32 %v1672, %v1768
      %v1817 = vmul.f32 %v1673, %v1769
      %v1818 = vmul.f32 %v1674, %v1770
      %v1819 = vmul.f32 %v1675, %v1771
      %v1820 = vmul.f32 %v1676, %v1772
      %v1821 = vmul.f32 %v1677, %v1773
      %v1822 = vmul.f32 %v1678, %v1774
      %v1823 = vmul.f32 %v1679, %v1775
      %v1824 = vmul.f32 %v1680, %v1776
      %v1825 = vmul.f32 %v1681, %v1777
      %v1826 = vmul.f32 %v1682, %v1778
      %v1827 = vmul.f32 %v1683, %v1779
      %v1828 = vmul.f32 %v1684, %v1780
      %v1829 = vmul.f32 %v1685, %v1781
      %v1830 = vmul.f32 %v1686, %v1782
      %v1831 = vmul.f32 %v1687, %v1783
      %v1832 = vmul.f32 %v1688, %v1784
      %v1833 = vmul.f32 %v1689, %v1785
      %v1834 = vmul.f32 %v1690, %v1786
      %v1835 = vmul.f32 %v1691, %v1787
      %v1836 = vmul.f32 %v1020, %v1788
      %v1837 = vmul.f32 %v1021, %v1789
      %v1838 = vmul.f32 %v1022, %v1790
      %v1839 = vmul.f32 %v1023, %v1791
      %v1840 = vmul.f32 %v1024, %v1792
      %v1841 = vmul.f32 %v1025, %v1793
      %v1842 = vmul.f32 %v1026, %v1794
      %v1843 = vmul.f32 %v1027, %v1795
      %v1844 = vmul.f32 %v1028, %v1796
      %v1845 = vmul.f32 %v1029, %v1797
      %v1846 = vmul.f32 %v1030, %v1798
      %v1847 = vmul.f32 %v1031, %v1799
      %v1848 = vmul.f32 %v1032, %v1800
      %v1849 = vmul.f32 %v1033, %v1801
      %v1850 = vmul.f32 %v1034, %v1802
      %v1851 = vmul.f32 %v1035, %v1803
      %v1852 = vmul.f32 %v1036, %v1804
      %v1853 = vmul.f32 %v1037, %v1805
      %v1854 = vmul.f32 %v1038, %v1806
      %v1855 = vmul.f32 %v1039, %v1807
      %v1856 = vmul.f32 %v1040, %v1808
      %v1857 = vmul.f32 %v1041, %v1809
      %v1858 = vmul.f32 %v1042, %v1810
      %v1859 = vmul.f32 %v1043, %v1811
      %v1860 = vmul.f32 %v1044, %v1812
      %v1861 = vmul.f32 %v1045, %v1813
      %v1862 = vmul.f32 %v1046, %v1814
      %v1863 = vmul.f32 %v1047, %v1815
      %v1864 = vmul.f32 %v1048, %v1816
      %v1865 = vmul.f32 %v1049, %v1817
      %v1866 = vmul.f32 %v1050, %v1818
      %v1867 = vmul.f32 %v1051, %v1819
      %v1868 = vmul.f32 %v1052, %v1820
      %v1869 = vmul.f32 %v1053, %v1821
      %v1870 = vmul.f32 %v1054, %v1822
      %v1871 = vmul.f32 %v1055, %v1823
      %v1872 = vmul.f32 %v1056, %v1824
      %v1873 = vmul.f32 %v1057, %v1825
      %v1874 = vmul.f32 %v1058, %v1826
      %v1875 = vmul.f32 %v1059, %v1827
      %v1876 = vmul.f32 %v1060, %v1828
      %v1877 = vmul.f32 %v1061, %v1829
      %v1878 = vmul.f32 %v1062, %v1830
      %v1879 = vmul.f32 %v1063, %v1831
      %v1880 = vmul.f32 %v1064, %v1832
      %v1881 = vmul.f32 %v1065, %v1833
      %v1882 = vmul.f32 %v1066, %v1834
      %v1883 = vmul.f32 %v1067, %v1835
      %1932 = vrot.lane.b32.xlu0 %v1836, 1
      %v1933 = vpop.permute.xlu0 %1932
      %1934 = vrot.lane.b32.xlu0 %v1837, 1
      %v1935 = vpop.permute.xlu0 %1934
      %1936 = vrot.lane.b32.xlu0 %v1838, 1
      %v1937 = vpop.permute.xlu0 %1936
      %1938 = vrot.lane.b32.xlu0 %v1839, 1
      %v1939 = vpop.permute.xlu0 %1938
      %1940 = vrot.lane.b32.xlu0 %v1840, 1
      %v1941 = vpop.permute.xlu0 %1940
      %1942 = vrot.lane.b32.xlu0 %v1841, 1
      %v1943 = vpop.permute.xlu0 %1942
      %1944 = vrot.lane.b32.xlu0 %v1842, 1
      %v1945 = vpop.permute.xlu0 %1944
      %1946 = vrot.lane.b32.xlu0 %v1843, 1
      %v1947 = vpop.permute.xlu0 %1946
      %1948 = vrot.lane.b32.xlu0 %v1844, 1
      %v1949 = vpop.permute.xlu0 %1948
      %1950 = vrot.lane.b32.xlu0 %v1845, 1
      %v1951 = vpop.permute.xlu0 %1950
      %1952 = vrot.lane.b32.xlu0 %v1846, 1
      %v1953 = vpop.permute.xlu0 %1952
      %1954 = vrot.lane.b32.xlu0 %v1847, 1
      %v1955 = vpop.permute.xlu0 %1954
      %1956 = vrot.lane.b32.xlu0 %v1848, 1
      %v1957 = vpop.permute.xlu0 %1956
      %1958 = vrot.lane.b32.xlu0 %v1849, 1
      %v1959 = vpop.permute.xlu0 %1958
      %1960 = vrot.lane.b32.xlu0 %v1850, 1
      %v1961 = vpop.permute.xlu0 %1960
      %1962 = vrot.lane.b32.xlu0 %v1851, 1
      %v1963 = vpop.permute.xlu0 %1962
      %1964 = vrot.lane.b32.xlu0 %v1852, 1
      %v1965 = vpop.permute.xlu0 %1964
      %1966 = vrot.lane.b32.xlu0 %v1853, 1
      %v1967 = vpop.permute.xlu0 %1966
      %1968 = vrot.lane.b32.xlu0 %v1854, 1
      %v1969 = vpop.permute.xlu0 %1968
      %1970 = vrot.lane.b32.xlu0 %v1855, 1
      %v1971 = vpop.permute.xlu0 %1970
      %1972 = vrot.lane.b32.xlu0 %v1856, 1
      %v1973 = vpop.permute.xlu0 %1972
      %1974 = vrot.lane.b32.xlu0 %v1857, 1
      %v1975 = vpop.permute.xlu0 %1974
      %1976 = vrot.lane.b32.xlu0 %v1858, 1
      %v1977 = vpop.permute.xlu0 %1976
      %1978 = vrot.lane.b32.xlu0 %v1859, 1
      %v1979 = vpop.permute.xlu0 %1978
      %1980 = vrot.lane.b32.xlu0 %v1860, 1
      %v1981 = vpop.permute.xlu0 %1980
      %1982 = vrot.lane.b32.xlu0 %v1861, 1
      %v1983 = vpop.permute.xlu0 %1982
      %1984 = vrot.lane.b32.xlu0 %v1862, 1
      %v1985 = vpop.permute.xlu0 %1984
      %1986 = vrot.lane.b32.xlu0 %v1863, 1
      %v1987 = vpop.permute.xlu0 %1986
      %1988 = vrot.lane.b32.xlu0 %v1864, 1
      %v1989 = vpop.permute.xlu0 %1988
      %1990 = vrot.lane.b32.xlu0 %v1865, 1
      %v1991 = vpop.permute.xlu0 %1990
      %1992 = vrot.lane.b32.xlu0 %v1866, 1
      %v1993 = vpop.permute.xlu0 %1992
      %1994 = vrot.lane.b32.xlu0 %v1867, 1
      %v1995 = vpop.permute.xlu0 %1994
      %1996 = vrot.lane.b32.xlu0 %v1868, 1
      %v1997 = vpop.permute.xlu0 %1996
      %1998 = vrot.lane.b32.xlu0 %v1869, 1
      %v1999 = vpop.permute.xlu0 %1998
      %2000 = vrot.lane.b32.xlu0 %v1870, 1
      %v2001 = vpop.permute.xlu0 %2000
      %2002 = vrot.lane.b32.xlu0 %v1871, 1
      %v2003 = vpop.permute.xlu0 %2002
      %2004 = vrot.lane.b32.xlu0 %v1872, 1
      %v2005 = vpop.permute.xlu0 %2004
      %2006 = vrot.lane.b32.xlu0 %v1873, 1
      %v2007 = vpop.permute.xlu0 %2006
      %2008 = vrot.lane.b32.xlu0 %v1874, 1
      %v2009 = vpop.permute.xlu0 %2008
      %2010 = vrot.lane.b32.xlu0 %v1875, 1
      %v2011 = vpop.permute.xlu0 %2010
      %2012 = vrot.lane.b32.xlu0 %v1876, 1
      %v2013 = vpop.permute.xlu0 %2012
      %2014 = vrot.lane.b32.xlu0 %v1877, 1
      %v2015 = vpop.permute.xlu0 %2014
      %2016 = vrot.lane.b32.xlu0 %v1878, 1
      %v2017 = vpop.permute.xlu0 %2016
      %2018 = vrot.lane.b32.xlu0 %v1879, 1
      %v2019 = vpop.permute.xlu0 %2018
      %2020 = vrot.lane.b32.xlu0 %v1880, 1
      %v2021 = vpop.permute.xlu0 %2020
      %2022 = vrot.lane.b32.xlu0 %v1881, 1
      %v2023 = vpop.permute.xlu0 %2022
      %2024 = vrot.lane.b32.xlu0 %v1882, 1
      %v2025 = vpop.permute.xlu0 %2024
      %2026 = vrot.lane.b32.xlu0 %v1883, 1
      %v2027 = vpop.permute.xlu0 %2026
      %v2076 = vsub.f32 %v1644, %v1933
      %v2077 = vsub.f32 %v1645, %v1935
      %v2078 = vsub.f32 %v1646, %v1937
      %v2079 = vsub.f32 %v1647, %v1939
      %v2080 = vsub.f32 %v1648, %v1941
      %v2081 = vsub.f32 %v1649, %v1943
      %v2082 = vsub.f32 %v1650, %v1945
      %v2083 = vsub.f32 %v1651, %v1947
      %v2084 = vsub.f32 %v1652, %v1949
      %v2085 = vsub.f32 %v1653, %v1951
      %v2086 = vsub.f32 %v1654, %v1953
      %v2087 = vsub.f32 %v1655, %v1955
      %v2088 = vsub.f32 %v1656, %v1957
      %v2089 = vsub.f32 %v1657, %v1959
      %v2090 = vsub.f32 %v1658, %v1961
      %v2091 = vsub.f32 %v1659, %v1963
      %v2092 = vsub.f32 %v1660, %v1965
      %v2093 = vsub.f32 %v1661, %v1967
      %v2094 = vsub.f32 %v1662, %v1969
      %v2095 = vsub.f32 %v1663, %v1971
      %v2096 = vsub.f32 %v1664, %v1973
      %v2097 = vsub.f32 %v1665, %v1975
      %v2098 = vsub.f32 %v1666, %v1977
      %v2099 = vsub.f32 %v1667, %v1979
      %v2100 = vsub.f32 %v1668, %v1981
      %v2101 = vsub.f32 %v1669, %v1983
      %v2102 = vsub.f32 %v1670, %v1985
      %v2103 = vsub.f32 %v1671, %v1987
      %v2104 = vsub.f32 %v1672, %v1989
      %v2105 = vsub.f32 %v1673, %v1991
      %v2106 = vsub.f32 %v1674, %v1993
      %v2107 = vsub.f32 %v1675, %v1995
      %v2108 = vsub.f32 %v1676, %v1997
      %v2109 = vsub.f32 %v1677, %v1999
      %v2110 = vsub.f32 %v1678, %v2001
      %v2111 = vsub.f32 %v1679, %v2003
      %v2112 = vsub.f32 %v1680, %v2005
      %v2113 = vsub.f32 %v1681, %v2007
      %v2114 = vsub.f32 %v1682, %v2009
      %v2115 = vsub.f32 %v1683, %v2011
      %v2116 = vsub.f32 %v1684, %v2013
      %v2117 = vsub.f32 %v1685, %v2015
      %v2118 = vsub.f32 %v1686, %v2017
      %v2119 = vsub.f32 %v1687, %v2019
      %v2120 = vsub.f32 %v1688, %v2021
      %v2121 = vsub.f32 %v1689, %v2023
      %v2122 = vsub.f32 %v1690, %v2025
      %v2123 = vsub.f32 %v1691, %v2027
      %2125 = vset.pattern.permute.xlu0 0
      %2126 = vperm.xlu0 %2125, %v1788
      %v2127 = vpop.permute.xlu0 %2126
      %2130 = vset.pattern.permute.xlu0 0
      %2131 = vperm.xlu0 %2130, %v1789
      %v2132 = vpop.permute.xlu0 %2131
      %2135 = vset.pattern.permute.xlu0 0
      %2136 = vperm.xlu0 %2135, %v1790
      %v2137 = vpop.permute.xlu0 %2136
      %2140 = vset.pattern.permute.xlu0 0
      %2141 = vperm.xlu0 %2140, %v1791
      %v2142 = vpop.permute.xlu0 %2141
      %2145 = vset.pattern.permute.xlu0 0
      %2146 = vperm.xlu0 %2145, %v1792
      %v2147 = vpop.permute.xlu0 %2146
      %2150 = vset.pattern.permute.xlu0 0
      %2151 = vperm.xlu0 %2150, %v1793
      %v2152 = vpop.permute.xlu0 %2151
      %2155 = vset.pattern.permute.xlu0 0
      %2156 = vperm.xlu0 %2155, %v1794
      %v2157 = vpop.permute.xlu0 %2156
      %2160 = vset.pattern.permute.xlu0 0
      %2161 = vperm.xlu0 %2160, %v1795
      %v2162 = vpop.permute.xlu0 %2161
      %2165 = vset.pattern.permute.xlu0 0
      %2166 = vperm.xlu0 %2165, %v1796
      %v2167 = vpop.permute.xlu0 %2166
      %2170 = vset.pattern.permute.xlu0 0
      %2171 = vperm.xlu0 %2170, %v1797
      %v2172 = vpop.permute.xlu0 %2171
      %2175 = vset.pattern.permute.xlu0 0
      %2176 = vperm.xlu0 %2175, %v1798
      %v2177 = vpop.permute.xlu0 %2176
      %2180 = vset.pattern.permute.xlu0 0
      %2181 = vperm.xlu0 %2180, %v1799
      %v2182 = vpop.permute.xlu0 %2181
      %2185 = vset.pattern.permute.xlu0 0
      %2186 = vperm.xlu0 %2185, %v1800
      %v2187 = vpop.permute.xlu0 %2186
      %2190 = vset.pattern.permute.xlu0 0
      %2191 = vperm.xlu0 %2190, %v1801
      %v2192 = vpop.permute.xlu0 %2191
      %2195 = vset.pattern.permute.xlu0 0
      %2196 = vperm.xlu0 %2195, %v1802
      %v2197 = vpop.permute.xlu0 %2196
      %2200 = vset.pattern.permute.xlu0 0
      %2201 = vperm.xlu0 %2200, %v1803
      %v2202 = vpop.permute.xlu0 %2201
      %2205 = vset.pattern.permute.xlu0 0
      %2206 = vperm.xlu0 %2205, %v1804
      %v2207 = vpop.permute.xlu0 %2206
      %2210 = vset.pattern.permute.xlu0 0
      %2211 = vperm.xlu0 %2210, %v1805
      %v2212 = vpop.permute.xlu0 %2211
      %2215 = vset.pattern.permute.xlu0 0
      %2216 = vperm.xlu0 %2215, %v1806
      %v2217 = vpop.permute.xlu0 %2216
      %2220 = vset.pattern.permute.xlu0 0
      %2221 = vperm.xlu0 %2220, %v1807
      %v2222 = vpop.permute.xlu0 %2221
      %2225 = vset.pattern.permute.xlu0 0
      %2226 = vperm.xlu0 %2225, %v1808
      %v2227 = vpop.permute.xlu0 %2226
      %2230 = vset.pattern.permute.xlu0 0
      %2231 = vperm.xlu0 %2230, %v1809
      %v2232 = vpop.permute.xlu0 %2231
      %2235 = vset.pattern.permute.xlu0 0
      %2236 = vperm.xlu0 %2235, %v1810
      %v2237 = vpop.permute.xlu0 %2236
      %2240 = vset.pattern.permute.xlu0 0
      %2241 = vperm.xlu0 %2240, %v1811
      %v2242 = vpop.permute.xlu0 %2241
      %2245 = vset.pattern.permute.xlu0 0
      %2246 = vperm.xlu0 %2245, %v1812
      %v2247 = vpop.permute.xlu0 %2246
      %2250 = vset.pattern.permute.xlu0 0
      %2251 = vperm.xlu0 %2250, %v1813
      %v2252 = vpop.permute.xlu0 %2251
      %2255 = vset.pattern.permute.xlu0 0
      %2256 = vperm.xlu0 %2255, %v1814
      %v2257 = vpop.permute.xlu0 %2256
      %2260 = vset.pattern.permute.xlu0 0
      %2261 = vperm.xlu0 %2260, %v1815
      %v2262 = vpop.permute.xlu0 %2261
      %2265 = vset.pattern.permute.xlu0 0
      %2266 = vperm.xlu0 %2265, %v1816
      %v2267 = vpop.permute.xlu0 %2266
      %2270 = vset.pattern.permute.xlu0 0
      %2271 = vperm.xlu0 %2270, %v1817
      %v2272 = vpop.permute.xlu0 %2271
      %2275 = vset.pattern.permute.xlu0 0
      %2276 = vperm.xlu0 %2275, %v1818
      %v2277 = vpop.permute.xlu0 %2276
      %2280 = vset.pattern.permute.xlu0 0
      %2281 = vperm.xlu0 %2280, %v1819
      %v2282 = vpop.permute.xlu0 %2281
      %2285 = vset.pattern.permute.xlu0 0
      %2286 = vperm.xlu0 %2285, %v1820
      %v2287 = vpop.permute.xlu0 %2286
      %2290 = vset.pattern.permute.xlu0 0
      %2291 = vperm.xlu0 %2290, %v1821
      %v2292 = vpop.permute.xlu0 %2291
      %2295 = vset.pattern.permute.xlu0 0
      %2296 = vperm.xlu0 %2295, %v1822
      %v2297 = vpop.permute.xlu0 %2296
      %2300 = vset.pattern.permute.xlu0 0
      %2301 = vperm.xlu0 %2300, %v1823
      %v2302 = vpop.permute.xlu0 %2301
      %2305 = vset.pattern.permute.xlu0 0
      %2306 = vperm.xlu0 %2305, %v1824
      %v2307 = vpop.permute.xlu0 %2306
      %2310 = vset.pattern.permute.xlu0 0
      %2311 = vperm.xlu0 %2310, %v1825
      %v2312 = vpop.permute.xlu0 %2311
      %2315 = vset.pattern.permute.xlu0 0
      %2316 = vperm.xlu0 %2315, %v1826
      %v2317 = vpop.permute.xlu0 %2316
      %2320 = vset.pattern.permute.xlu0 0
      %2321 = vperm.xlu0 %2320, %v1827
      %v2322 = vpop.permute.xlu0 %2321
      %2325 = vset.pattern.permute.xlu0 0
      %2326 = vperm.xlu0 %2325, %v1828
      %v2327 = vpop.permute.xlu0 %2326
      %2330 = vset.pattern.permute.xlu0 0
      %2331 = vperm.xlu0 %2330, %v1829
      %v2332 = vpop.permute.xlu0 %2331
      %2335 = vset.pattern.permute.xlu0 0
      %2336 = vperm.xlu0 %2335, %v1830
      %v2337 = vpop.permute.xlu0 %2336
      %2340 = vset.pattern.permute.xlu0 0
      %2341 = vperm.xlu0 %2340, %v1831
      %v2342 = vpop.permute.xlu0 %2341
      %2345 = vset.pattern.permute.xlu0 0
      %2346 = vperm.xlu0 %2345, %v1832
      %v2347 = vpop.permute.xlu0 %2346
      %2350 = vset.pattern.permute.xlu0 0
      %2351 = vperm.xlu0 %2350, %v1833
      %v2352 = vpop.permute.xlu0 %2351
      %2355 = vset.pattern.permute.xlu0 0
      %2356 = vperm.xlu0 %2355, %v1834
      %v2357 = vpop.permute.xlu0 %2356
      %2360 = vset.pattern.permute.xlu0 0
      %2361 = vperm.xlu0 %2360, %v1835
      %v2362 = vpop.permute.xlu0 %2361
      %v2364 = vmul.f32 %v1068, %v2127
      %v2365 = vmul.f32 %v1069, %v2127
      %v2366 = vmul.f32 %v1070, %v2132
      %v2367 = vmul.f32 %v1071, %v2132
      %v2368 = vmul.f32 %v1072, %v2137
      %v2369 = vmul.f32 %v1073, %v2137
      %v2370 = vmul.f32 %v1074, %v2142
      %v2371 = vmul.f32 %v1075, %v2142
      %v2372 = vmul.f32 %v1076, %v2147
      %v2373 = vmul.f32 %v1077, %v2147
      %v2374 = vmul.f32 %v1078, %v2152
      %v2375 = vmul.f32 %v1079, %v2152
      %v2376 = vmul.f32 %v1080, %v2157
      %v2377 = vmul.f32 %v1081, %v2157
      %v2378 = vmul.f32 %v1082, %v2162
      %v2379 = vmul.f32 %v1083, %v2162
      %v2380 = vmul.f32 %v1084, %v2167
      %v2381 = vmul.f32 %v1085, %v2167
      %v2382 = vmul.f32 %v1086, %v2172
      %v2383 = vmul.f32 %v1087, %v2172
      %v2384 = vmul.f32 %v1088, %v2177
      %v2385 = vmul.f32 %v1089, %v2177
      %v2386 = vmul.f32 %v1090, %v2182
      %v2387 = vmul.f32 %v1091, %v2182
      %v2388 = vmul.f32 %v1092, %v2187
      %v2389 = vmul.f32 %v1093, %v2187
      %v2390 = vmul.f32 %v1094, %v2192
      %v2391 = vmul.f32 %v1095, %v2192
      %v2392 = vmul.f32 %v1096, %v2197
      %v2393 = vmul.f32 %v1097, %v2197
      %v2394 = vmul.f32 %v1098, %v2202
      %v2395 = vmul.f32 %v1099, %v2202
      %v2396 = vmul.f32 %v1100, %v2207
      %v2397 = vmul.f32 %v1101, %v2207
      %v2398 = vmul.f32 %v1102, %v2212
      %v2399 = vmul.f32 %v1103, %v2212
      %v2400 = vmul.f32 %v1104, %v2217
      %v2401 = vmul.f32 %v1105, %v2217
      %v2402 = vmul.f32 %v1106, %v2222
      %v2403 = vmul.f32 %v1107, %v2222
      %v2404 = vmul.f32 %v1108, %v2227
      %v2405 = vmul.f32 %v1109, %v2227
      %v2406 = vmul.f32 %v1110, %v2232
      %v2407 = vmul.f32 %v1111, %v2232
      %v2408 = vmul.f32 %v1112, %v2237
      %v2409 = vmul.f32 %v1113, %v2237
      %v2410 = vmul.f32 %v1114, %v2242
      %v2411 = vmul.f32 %v1115, %v2242
      %v2412 = vmul.f32 %v1116, %v2247
      %v2413 = vmul.f32 %v1117, %v2247
      %v2414 = vmul.f32 %v1118, %v2252
      %v2415 = vmul.f32 %v1119, %v2252
      %v2416 = vmul.f32 %v1120, %v2257
      %v2417 = vmul.f32 %v1121, %v2257
      %v2418 = vmul.f32 %v1122, %v2262
      %v2419 = vmul.f32 %v1123, %v2262
      %v2420 = vmul.f32 %v1124, %v2267
      %v2421 = vmul.f32 %v1125, %v2267
      %v2422 = vmul.f32 %v1126, %v2272
      %v2423 = vmul.f32 %v1127, %v2272
      %v2424 = vmul.f32 %v1128, %v2277
      %v2425 = vmul.f32 %v1129, %v2277
      %v2426 = vmul.f32 %v1130, %v2282
      %v2427 = vmul.f32 %v1131, %v2282
      %v2428 = vmul.f32 %v1132, %v2287
      %v2429 = vmul.f32 %v1133, %v2287
      %v2430 = vmul.f32 %v1134, %v2292
      %v2431 = vmul.f32 %v1135, %v2292
      %v2432 = vmul.f32 %v1136, %v2297
      %v2433 = vmul.f32 %v1137, %v2297
      %v2434 = vmul.f32 %v1138, %v2302
      %v2435 = vmul.f32 %v1139, %v2302
      %v2436 = vmul.f32 %v1140, %v2307
      %v2437 = vmul.f32 %v1141, %v2307
      %v2438 = vmul.f32 %v1142, %v2312
      %v2439 = vmul.f32 %v1143, %v2312
      %v2440 = vmul.f32 %v1144, %v2317
      %v2441 = vmul.f32 %v1145, %v2317
      %v2442 = vmul.f32 %v1146, %v2322
      %v2443 = vmul.f32 %v1147, %v2322
      %v2444 = vmul.f32 %v1148, %v2327
      %v2445 = vmul.f32 %v1149, %v2327
      %v2446 = vmul.f32 %v1150, %v2332
      %v2447 = vmul.f32 %v1151, %v2332
      %v2448 = vmul.f32 %v1152, %v2337
      %v2449 = vmul.f32 %v1153, %v2337
      %v2450 = vmul.f32 %v1154, %v2342
      %v2451 = vmul.f32 %v1155, %v2342
      %v2452 = vmul.f32 %v1156, %v2347
      %v2453 = vmul.f32 %v1157, %v2347
      %v2454 = vmul.f32 %v1158, %v2352
      %v2455 = vmul.f32 %v1159, %v2352
      %v2456 = vmul.f32 %v1160, %v2357
      %v2457 = vmul.f32 %v1161, %v2357
      %v2458 = vmul.f32 %v1162, %v2362
      %v2459 = vmul.f32 %v1163, %v2362
      %2461 = vset.pattern.permute.xlu0 1
      %2462 = vperm.xlu0 %2461, %v2076
      %v2463 = vpop.permute.xlu0 %2462
      %2466 = vset.pattern.permute.xlu0 1
      %2467 = vperm.xlu0 %2466, %v2077
      %v2468 = vpop.permute.xlu0 %2467
      %2471 = vset.pattern.permute.xlu0 1
      %2472 = vperm.xlu0 %2471, %v2078
      %v2473 = vpop.permute.xlu0 %2472
      %2476 = vset.pattern.permute.xlu0 1
      %2477 = vperm.xlu0 %2476, %v2079
      %v2478 = vpop.permute.xlu0 %2477
      %2481 = vset.pattern.permute.xlu0 1
      %2482 = vperm.xlu0 %2481, %v2080
      %v2483 = vpop.permute.xlu0 %2482
      %2486 = vset.pattern.permute.xlu0 1
      %2487 = vperm.xlu0 %2486, %v2081
      %v2488 = vpop.permute.xlu0 %2487
      %2491 = vset.pattern.permute.xlu0 1
      %2492 = vperm.xlu0 %2491, %v2082
      %v2493 = vpop.permute.xlu0 %2492
      %2496 = vset.pattern.permute.xlu0 1
      %2497 = vperm.xlu0 %2496, %v2083
      %v2498 = vpop.permute.xlu0 %2497
      %2501 = vset.pattern.permute.xlu0 1
      %2502 = vperm.xlu0 %2501, %v2084
      %v2503 = vpop.permute.xlu0 %2502
      %2506 = vset.pattern.permute.xlu0 1
      %2507 = vperm.xlu0 %2506, %v2085
      %v2508 = vpop.permute.xlu0 %2507
      %2511 = vset.pattern.permute.xlu0 1
      %2512 = vperm.xlu0 %2511, %v2086
      %v2513 = vpop.permute.xlu0 %2512
      %2516 = vset.pattern.permute.xlu0 1
      %2517 = vperm.xlu0 %2516, %v2087
      %v2518 = vpop.permute.xlu0 %2517
      %2521 = vset.pattern.permute.xlu0 1
      %2522 = vperm.xlu0 %2521, %v2088
      %v2523 = vpop.permute.xlu0 %2522
      %2526 = vset.pattern.permute.xlu0 1
      %2527 = vperm.xlu0 %2526, %v2089
      %v2528 = vpop.permute.xlu0 %2527
      %2531 = vset.pattern.permute.xlu0 1
      %2532 = vperm.xlu0 %2531, %v2090
      %v2533 = vpop.permute.xlu0 %2532
      %2536 = vset.pattern.permute.xlu0 1
      %2537 = vperm.xlu0 %2536, %v2091
      %v2538 = vpop.permute.xlu0 %2537
      %2541 = vset.pattern.permute.xlu0 1
      %2542 = vperm.xlu0 %2541, %v2092
      %v2543 = vpop.permute.xlu0 %2542
      %2546 = vset.pattern.permute.xlu0 1
      %2547 = vperm.xlu0 %2546, %v2093
      %v2548 = vpop.permute.xlu0 %2547
      %2551 = vset.pattern.permute.xlu0 1
      %2552 = vperm.xlu0 %2551, %v2094
      %v2553 = vpop.permute.xlu0 %2552
      %2556 = vset.pattern.permute.xlu0 1
      %2557 = vperm.xlu0 %2556, %v2095
      %v2558 = vpop.permute.xlu0 %2557
      %2561 = vset.pattern.permute.xlu0 1
      %2562 = vperm.xlu0 %2561, %v2096
      %v2563 = vpop.permute.xlu0 %2562
      %2566 = vset.pattern.permute.xlu0 1
      %2567 = vperm.xlu0 %2566, %v2097
      %v2568 = vpop.permute.xlu0 %2567
      %2571 = vset.pattern.permute.xlu0 1
      %2572 = vperm.xlu0 %2571, %v2098
      %v2573 = vpop.permute.xlu0 %2572
      %2576 = vset.pattern.permute.xlu0 1
      %2577 = vperm.xlu0 %2576, %v2099
      %v2578 = vpop.permute.xlu0 %2577
      %2581 = vset.pattern.permute.xlu0 1
      %2582 = vperm.xlu0 %2581, %v2100
      %v2583 = vpop.permute.xlu0 %2582
      %2586 = vset.pattern.permute.xlu0 1
      %2587 = vperm.xlu0 %2586, %v2101
      %v2588 = vpop.permute.xlu0 %2587
      %2591 = vset.pattern.permute.xlu0 1
      %2592 = vperm.xlu0 %2591, %v2102
      %v2593 = vpop.permute.xlu0 %2592
      %2596 = vset.pattern.permute.xlu0 1
      %2597 = vperm.xlu0 %2596, %v2103
      %v2598 = vpop.permute.xlu0 %2597
      %2601 = vset.pattern.permute.xlu0 1
      %2602 = vperm.xlu0 %2601, %v2104
      %v2603 = vpop.permute.xlu0 %2602
      %2606 = vset.pattern.permute.xlu0 1
      %2607 = vperm.xlu0 %2606, %v2105
      %v2608 = vpop.permute.xlu0 %2607
      %2611 = vset.pattern.permute.xlu0 1
      %2612 = vperm.xlu0 %2611, %v2106
      %v2613 = vpop.permute.xlu0 %2612
      %2616 = vset.pattern.permute.xlu0 1
      %2617 = vperm.xlu0 %2616, %v2107
      %v2618 = vpop.permute.xlu0 %2617
      %2621 = vset.pattern.permute.xlu0 1
      %2622 = vperm.xlu0 %2621, %v2108
      %v2623 = vpop.permute.xlu0 %2622
      %2626 = vset.pattern.permute.xlu0 1
      %2627 = vperm.xlu0 %2626, %v2109
      %v2628 = vpop.permute.xlu0 %2627
      %2631 = vset.pattern.permute.xlu0 1
      %2632 = vperm.xlu0 %2631, %v2110
      %v2633 = vpop.permute.xlu0 %2632
      %2636 = vset.pattern.permute.xlu0 1
      %2637 = vperm.xlu0 %2636, %v2111
      %v2638 = vpop.permute.xlu0 %2637
      %2641 = vset.pattern.permute.xlu0 1
      %2642 = vperm.xlu0 %2641, %v2112
      %v2643 = vpop.permute.xlu0 %2642
      %2646 = vset.pattern.permute.xlu0 1
      %2647 = vperm.xlu0 %2646, %v2113
      %v2648 = vpop.permute.xlu0 %2647
      %2651 = vset.pattern.permute.xlu0 1
      %2652 = vperm.xlu0 %2651, %v2114
      %v2653 = vpop.permute.xlu0 %2652
      %2656 = vset.pattern.permute.xlu0 1
      %2657 = vperm.xlu0 %2656, %v2115
      %v2658 = vpop.permute.xlu0 %2657
      %2661 = vset.pattern.permute.xlu0 1
      %2662 = vperm.xlu0 %2661, %v2116
      %v2663 = vpop.permute.xlu0 %2662
      %2666 = vset.pattern.permute.xlu0 1
      %2667 = vperm.xlu0 %2666, %v2117
      %v2668 = vpop.permute.xlu0 %2667
      %2671 = vset.pattern.permute.xlu0 1
      %2672 = vperm.xlu0 %2671, %v2118
      %v2673 = vpop.permute.xlu0 %2672
      %2676 = vset.pattern.permute.xlu0 1
      %2677 = vperm.xlu0 %2676, %v2119
      %v2678 = vpop.permute.xlu0 %2677
      %2681 = vset.pattern.permute.xlu0 1
      %2682 = vperm.xlu0 %2681, %v2120
      %v2683 = vpop.permute.xlu0 %2682
      %2686 = vset.pattern.permute.xlu0 1
      %2687 = vperm.xlu0 %2686, %v2121
      %v2688 = vpop.permute.xlu0 %2687
      %2691 = vset.pattern.permute.xlu0 1
      %2692 = vperm.xlu0 %2691, %v2122
      %v2693 = vpop.permute.xlu0 %2692
      %2696 = vset.pattern.permute.xlu0 1
      %2697 = vperm.xlu0 %2696, %v2123
      %v2698 = vpop.permute.xlu0 %2697
      %v2700 = vadd.f32 %v2364, %v2463
      %v2701 = vadd.f32 %v2365, %v2463
      %v2702 = vadd.f32 %v2366, %v2468
      %v2703 = vadd.f32 %v2367, %v2468
      %v2704 = vadd.f32 %v2368, %v2473
      %v2705 = vadd.f32 %v2369, %v2473
      %v2706 = vadd.f32 %v2370, %v2478
      %v2707 = vadd.f32 %v2371, %v2478
      %v2708 = vadd.f32 %v2372, %v2483
      %v2709 = vadd.f32 %v2373, %v2483
      %v2710 = vadd.f32 %v2374, %v2488
      %v2711 = vadd.f32 %v2375, %v2488
      %v2712 = vadd.f32 %v2376, %v2493
      %v2713 = vadd.f32 %v2377, %v2493
      %v2714 = vadd.f32 %v2378, %v2498
      %v2715 = vadd.f32 %v2379, %v2498
      %v2716 = vadd.f32 %v2380, %v2503
      %v2717 = vadd.f32 %v2381, %v2503
      %v2718 = vadd.f32 %v2382, %v2508
      %v2719 = vadd.f32 %v2383, %v2508
      %v2720 = vadd.f32 %v2384, %v2513
      %v2721 = vadd.f32 %v2385, %v2513
      %v2722 = vadd.f32 %v2386, %v2518
      %v2723 = vadd.f32 %v2387, %v2518
      %v2724 = vadd.f32 %v2388, %v2523
      %v2725 = vadd.f32 %v2389, %v2523
      %v2726 = vadd.f32 %v2390, %v2528
      %v2727 = vadd.f32 %v2391, %v2528
      %v2728 = vadd.f32 %v2392, %v2533
      %v2729 = vadd.f32 %v2393, %v2533
      %v2730 = vadd.f32 %v2394, %v2538
      %v2731 = vadd.f32 %v2395, %v2538
      %v2732 = vadd.f32 %v2396, %v2543
      %v2733 = vadd.f32 %v2397, %v2543
      %v2734 = vadd.f32 %v2398, %v2548
      %v2735 = vadd.f32 %v2399, %v2548
      %v2736 = vadd.f32 %v2400, %v2553
      %v2737 = vadd.f32 %v2401, %v2553
      %v2738 = vadd.f32 %v2402, %v2558
      %v2739 = vadd.f32 %v2403, %v2558
      %v2740 = vadd.f32 %v2404, %v2563
      %v2741 = vadd.f32 %v2405, %v2563
      %v2742 = vadd.f32 %v2406, %v2568
      %v2743 = vadd.f32 %v2407, %v2568
      %v2744 = vadd.f32 %v2408, %v2573
      %v2745 = vadd.f32 %v2409, %v2573
      %v2746 = vadd.f32 %v2410, %v2578
      %v2747 = vadd.f32 %v2411, %v2578
      %v2748 = vadd.f32 %v2412, %v2583
      %v2749 = vadd.f32 %v2413, %v2583
      %v2750 = vadd.f32 %v2414, %v2588
      %v2751 = vadd.f32 %v2415, %v2588
      %v2752 = vadd.f32 %v2416, %v2593
      %v2753 = vadd.f32 %v2417, %v2593
      %v2754 = vadd.f32 %v2418, %v2598
      %v2755 = vadd.f32 %v2419, %v2598
      %v2756 = vadd.f32 %v2420, %v2603
      %v2757 = vadd.f32 %v2421, %v2603
      %v2758 = vadd.f32 %v2422, %v2608
      %v2759 = vadd.f32 %v2423, %v2608
      %v2760 = vadd.f32 %v2424, %v2613
      %v2761 = vadd.f32 %v2425, %v2613
      %v2762 = vadd.f32 %v2426, %v2618
      %v2763 = vadd.f32 %v2427, %v2618
      %v2764 = vadd.f32 %v2428, %v2623
      %v2765 = vadd.f32 %v2429, %v2623
      %v2766 = vadd.f32 %v2430, %v2628
      %v2767 = vadd.f32 %v2431, %v2628
      %v2768 = vadd.f32 %v2432, %v2633
      %v2769 = vadd.f32 %v2433, %v2633
      %v2770 = vadd.f32 %v2434, %v2638
      %v2771 = vadd.f32 %v2435, %v2638
      %v2772 = vadd.f32 %v2436, %v2643
      %v2773 = vadd.f32 %v2437, %v2643
      %v2774 = vadd.f32 %v2438, %v2648
      %v2775 = vadd.f32 %v2439, %v2648
      %v2776 = vadd.f32 %v2440, %v2653
      %v2777 = vadd.f32 %v2441, %v2653
      %v2778 = vadd.f32 %v2442, %v2658
      %v2779 = vadd.f32 %v2443, %v2658
      %v2780 = vadd.f32 %v2444, %v2663
      %v2781 = vadd.f32 %v2445, %v2663
      %v2782 = vadd.f32 %v2446, %v2668
      %v2783 = vadd.f32 %v2447, %v2668
      %v2784 = vadd.f32 %v2448, %v2673
      %v2785 = vadd.f32 %v2449, %v2673
      %v2786 = vadd.f32 %v2450, %v2678
      %v2787 = vadd.f32 %v2451, %v2678
      %v2788 = vadd.f32 %v2452, %v2683
      %v2789 = vadd.f32 %v2453, %v2683
      %v2790 = vadd.f32 %v2454, %v2688
      %v2791 = vadd.f32 %v2455, %v2688
      %v2792 = vadd.f32 %v2456, %v2693
      %v2793 = vadd.f32 %v2457, %v2693
      %v2794 = vadd.f32 %v2458, %v2698
      %v2795 = vadd.f32 %v2459, %v2698
      %2796 = vst [vmem:[%s223] sm:$0xff] %v2700
      %2797 = vst.msk [vmem:[%s223 + $0x8] sm:$0xff] %vm684, %v2701
      %2798 = vst [vmem:[%s223 + $0x10] sm:$0xff] %v2702
      %2799 = vst.msk [vmem:[%s223 + $0x18] sm:$0xff] %vm684, %v2703
      %2800 = vst [vmem:[%s223 + $0x20] sm:$0xff] %v2704
      %2801 = vst.msk [vmem:[%s223 + $0x28] sm:$0xff] %vm684, %v2705
      %2802 = vst [vmem:[%s223 + $0x30] sm:$0xff] %v2706
      %2803 = vst.msk [vmem:[%s223 + $0x38] sm:$0xff] %vm684, %v2707
      %2804 = vst [vmem:[%s223 + $0x40] sm:$0xff] %v2708
      %2805 = vst.msk [vmem:[%s223 + $0x48] sm:$0xff] %vm684, %v2709
      %2806 = vst [vmem:[%s223 + $0x50] sm:$0xff] %v2710
      %2807 = vst.msk [vmem:[%s223 + $0x58] sm:$0xff] %vm684, %v2711
      %2808 = vst [vmem:[%s223 + $0x60] sm:$0xff] %v2712
      %2809 = vst.msk [vmem:[%s223 + $0x68] sm:$0xff] %vm684, %v2713
      %2810 = vst [vmem:[%s223 + $0x70] sm:$0xff] %v2714
      %2811 = vst.msk [vmem:[%s223 + $0x78] sm:$0xff] %vm684, %v2715
      %2812 = vst [vmem:[%s223 + $0x80] sm:$0xff] %v2716
      %2813 = vst.msk [vmem:[%s223 + $0x88] sm:$0xff] %vm684, %v2717
      %2814 = vst [vmem:[%s223 + $0x90] sm:$0xff] %v2718
      %2815 = vst.msk [vmem:[%s223 + $0x98] sm:$0xff] %vm684, %v2719
      %2816 = vst [vmem:[%s223 + $0xa0] sm:$0xff] %v2720
      %2817 = vst.msk [vmem:[%s223 + $0xa8] sm:$0xff] %vm684, %v2721
      %2818 = vst [vmem:[%s223 + $0xb0] sm:$0xff] %v2722
      %2819 = vst.msk [vmem:[%s223 + $0xb8] sm:$0xff] %vm684, %v2723
      %2820 = vst [vmem:[%s223 + $0xc0] sm:$0xff] %v2724
      %2821 = vst.msk [vmem:[%s223 + $0xc8] sm:$0xff] %vm684, %v2725
      %2822 = vst [vmem:[%s223 + $0xd0] sm:$0xff] %v2726
      %2823 = vst.msk [vmem:[%s223 + $0xd8] sm:$0xff] %vm684, %v2727
      %2824 = vst [vmem:[%s223 + $0xe0] sm:$0xff] %v2728
      %2825 = vst.msk [vmem:[%s223 + $0xe8] sm:$0xff] %vm684, %v2729
      %2826 = vst [vmem:[%s223 + $0xf0] sm:$0xff] %v2730
      %2827 = vst.msk [vmem:[%s223 + $0xf8] sm:$0xff] %vm684, %v2731
      %2828 = vst [vmem:[%s223 + $0x100] sm:$0xff] %v2732
      %2829 = vst.msk [vmem:[%s223 + $0x108] sm:$0xff] %vm684, %v2733
      %2830 = vst [vmem:[%s223 + $0x110] sm:$0xff] %v2734
      %2831 = vst.msk [vmem:[%s223 + $0x118] sm:$0xff] %vm684, %v2735
      %2832 = vst [vmem:[%s223 + $0x120] sm:$0xff] %v2736
      %2833 = vst.msk [vmem:[%s223 + $0x128] sm:$0xff] %vm684, %v2737
      %2834 = vst [vmem:[%s223 + $0x130] sm:$0xff] %v2738
      %2835 = vst.msk [vmem:[%s223 + $0x138] sm:$0xff] %vm684, %v2739
      %2836 = vst [vmem:[%s223 + $0x140] sm:$0xff] %v2740
      %2837 = vst.msk [vmem:[%s223 + $0x148] sm:$0xff] %vm684, %v2741
      %2838 = vst [vmem:[%s223 + $0x150] sm:$0xff] %v2742
      %2839 = vst.msk [vmem:[%s223 + $0x158] sm:$0xff] %vm684, %v2743
      %2840 = vst [vmem:[%s223 + $0x160] sm:$0xff] %v2744
      %2841 = vst.msk [vmem:[%s223 + $0x168] sm:$0xff] %vm684, %v2745
      %2842 = vst [vmem:[%s223 + $0x170] sm:$0xff] %v2746
      %2843 = vst.msk [vmem:[%s223 + $0x178] sm:$0xff] %vm684, %v2747
      %2844 = vst [vmem:[%s223 + $0x180] sm:$0xff] %v2748
      %2845 = vst.msk [vmem:[%s223 + $0x188] sm:$0xff] %vm684, %v2749
      %2846 = vst [vmem:[%s223 + $0x190] sm:$0xff] %v2750
      %2847 = vst.msk [vmem:[%s223 + $0x198] sm:$0xff] %vm684, %v2751
      %2848 = vst [vmem:[%s223 + $0x1a0] sm:$0xff] %v2752
      %2849 = vst.msk [vmem:[%s223 + $0x1a8] sm:$0xff] %vm684, %v2753
      %2850 = vst [vmem:[%s223 + $0x1b0] sm:$0xff] %v2754
      %2851 = vst.msk [vmem:[%s223 + $0x1b8] sm:$0xff] %vm684, %v2755
      %2852 = vst [vmem:[%s223 + $0x1c0] sm:$0xff] %v2756
      %2853 = vst.msk [vmem:[%s223 + $0x1c8] sm:$0xff] %vm684, %v2757
      %2854 = vst [vmem:[%s223 + $0x1d0] sm:$0xff] %v2758
      %2855 = vst.msk [vmem:[%s223 + $0x1d8] sm:$0xff] %vm684, %v2759
      %2856 = vst [vmem:[%s223 + $0x1e0] sm:$0xff] %v2760
      %2857 = vst.msk [vmem:[%s223 + $0x1e8] sm:$0xff] %vm684, %v2761
      %2858 = vst [vmem:[%s223 + $0x1f0] sm:$0xff] %v2762
      %2859 = vst.msk [vmem:[%s223 + $0x1f8] sm:$0xff] %vm684, %v2763
      %2860 = vst [vmem:[%s223 + $0x200] sm:$0xff] %v2764
      %2861 = vst.msk [vmem:[%s223 + $0x208] sm:$0xff] %vm684, %v2765
      %2862 = vst [vmem:[%s223 + $0x210] sm:$0xff] %v2766
      %2863 = vst.msk [vmem:[%s223 + $0x218] sm:$0xff] %vm684, %v2767
      %2864 = vst [vmem:[%s223 + $0x220] sm:$0xff] %v2768
      %2865 = vst.msk [vmem:[%s223 + $0x228] sm:$0xff] %vm684, %v2769
      %2866 = vst [vmem:[%s223 + $0x230] sm:$0xff] %v2770
      %2867 = vst.msk [vmem:[%s223 + $0x238] sm:$0xff] %vm684, %v2771
      %2868 = vst [vmem:[%s223 + $0x240] sm:$0xff] %v2772
      %2869 = vst.msk [vmem:[%s223 + $0x248] sm:$0xff] %vm684, %v2773
      %2870 = vst [vmem:[%s223 + $0x250] sm:$0xff] %v2774
      %2871 = vst.msk [vmem:[%s223 + $0x258] sm:$0xff] %vm684, %v2775
      %2872 = vst [vmem:[%s223 + $0x260] sm:$0xff] %v2776
      %2873 = vst.msk [vmem:[%s223 + $0x268] sm:$0xff] %vm684, %v2777
      %2874 = vst [vmem:[%s223 + $0x270] sm:$0xff] %v2778
      %2875 = vst.msk [vmem:[%s223 + $0x278] sm:$0xff] %vm684, %v2779
      %2876 = vst [vmem:[%s223 + $0x280] sm:$0xff] %v2780
      %2877 = vst.msk [vmem:[%s223 + $0x288] sm:$0xff] %vm684, %v2781
      %2878 = vst [vmem:[%s223 + $0x290] sm:$0xff] %v2782
      %2879 = vst.msk [vmem:[%s223 + $0x298] sm:$0xff] %vm684, %v2783
      %2880 = vst [vmem:[%s223 + $0x2a0] sm:$0xff] %v2784
      %2881 = vst.msk [vmem:[%s223 + $0x2a8] sm:$0xff] %vm684, %v2785
      %2882 = vst [vmem:[%s223 + $0x2b0] sm:$0xff] %v2786
      %2883 = vst.msk [vmem:[%s223 + $0x2b8] sm:$0xff] %vm684, %v2787
      %2884 = vst [vmem:[%s223 + $0x2c0] sm:$0xff] %v2788
      %2885 = vst.msk [vmem:[%s223 + $0x2c8] sm:$0xff] %vm684, %v2789
      %2886 = vst [vmem:[%s223 + $0x2d0] sm:$0xff] %v2790
      %2887 = vst.msk [vmem:[%s223 + $0x2d8] sm:$0xff] %vm684, %v2791
      %2888 = vst [vmem:[%s223 + $0x2e0] sm:$0xff] %v2792
      %2889 = vst.msk [vmem:[%s223 + $0x2e8] sm:$0xff] %vm684, %v2793
      %2890 = vst [vmem:[%s223 + $0x2f0] sm:$0xff] %v2794
      %2891 = vst.msk [vmem:[%s223 + $0x2f8] sm:$0xff] %vm684, %v2795
      %s2892 = smul.u32 48, %s15
      %p2893 = scmp.lt.s32.totalorder %s2892, 95
      %s2894 = scalar_select %p2893, %s2892, 95
      %s2895 = smul.addr %s2894, 2
      %s2896 = smul.addr %s2895, 8
      %s2897 = scalar_lea.vmem %s4, %s2896
      // Predicated region
      $region37: #{tpu_custom_call.1} parent=35 // pred_check
        %p2898 = pneg %p127
      $region38: #{tpu_custom_call.1} parent=35 // pred_check_branch
        %2900 = sbr.rel (%p2898) target = $region40
      $region39: #{tpu_custom_call.1} parent=35 // pred_region
        %s2901 = smul.u32 48, %s15
      $region40: #{tpu_custom_call.1} parent=35 // pred_fallthru
        _
    $region36: #{tpu_custom_call.1} parent=5 // pred_fallthru
      _
    %p2902 = scmp.le.s32.totalorder 2, %s10
    // Predicated region
    $region41: #{tpu_custom_call.1} parent=5 // pred_check
      %p2903 = pneg %p2902
    $region42: #{tpu_custom_call.1} parent=5 // pred_check_branch
      %2905 = sbr.rel (%p2903) target = $region44
    $region43: #{tpu_custom_call.1} parent=5 // pred_region
      %s2906 = ssub.s32 %s10, 2
      // Predicated region
      $region45: #{tpu_custom_call.1} parent=43 // pred_check
        %p2907 = pneg %p133
      $region46: #{tpu_custom_call.1} parent=43 // pred_check_branch
        %2909 = sbr.rel (%p2907) target = $region48
      $region47: #{tpu_custom_call.1} parent=43 // pred_region
        %s2910 = smul.u32 48, %s16
        %p2911 = scmp.lt.s32.totalorder %s2910, 95
        %s2912 = scalar_select %p2911, %s2910, 95
        %s2913 = smul.addr %s2912, 2
        %s2914 = smul.addr %s2913, 8
        %s2915 = scalar_lea.vmem %s4, %s2914
      $region48: #{tpu_custom_call.1} parent=43 // pred_fallthru
        _
    $region44: #{tpu_custom_call.1} parent=5 // pred_fallthru
      _
  $region6: #{tpu_custom_call.1} parent=0 // loop_footer
    %s14 = sadd.s32 1, %s10
  $region7: #{tpu_custom_call.1} parent=0 // loop_footer_branch
    %9 = sbr.rel target = $region3
  $region8: #{tpu_custom_call.1} parent=0 // loop_exit
    _

</llo_original>
